<compile_context>
chip_gen: v5e
topology: v5e:2x2
jax: 0.10.0
libtpu: 0.0.40
codegen_flags: <defaults>
</compile_context>

<pallas_src>
import math
import functools

import jax
import jax.numpy as jnp
import numpy as np
from jax.experimental import pallas as pl
from jax.experimental.pallas import tpu as pltpu


def _level_metadata(img_size, n_levels, log2_hashmap_size, base_resolution,
                    finest_resolution):
    """Static per-level metadata, mirroring HashEmbedder1D.__init__/forward."""
    hashmap_size = 2 ** log2_hashmap_size
    if n_levels == 1:
        b = 1.0
    else:
        b = math.exp((math.log(finest_resolution) - math.log(base_resolution))
                     / (n_levels - 1))
    meta = []
    for i in range(n_levels):
        resolution = math.floor(base_resolution * (b ** i))
        grid_size = img_size / resolution
        use_mask = not (resolution ** 2 < hashmap_size)
        table_size = hashmap_size if use_mask else (resolution + 1) ** 2
        meta.append(dict(resolution=resolution, grid_size=grid_size,
                         use_mask=use_mask, table_size=table_size))
    return meta


def _fused_hash_embed_kernel(x_ref, tbl_ref, out_ref, *, level_params,
                             sum_t_pad, out_dim, n_feat):
    """One batch tile, all levels fused into a single one-hot gather matmul.

    x_ref:   (1, tb)                 f32  -- coordinates, batch on the lane axis
    tbl_ref: (2*out_dim, sum_t_pad)  f32  -- stacked [T ; D] block-diag table, transposed
    out_ref: (out_dim, tb)           f32  -- transposed, already-concatenated output
    """
    x = x_ref[...]                                     # (1, tb)
    tb = x.shape[1]

    # One row-iota for all levels (hoisted: JAX does not CSE broadcast_in_dim).
    row_iota = jax.lax.broadcasted_iota(jnp.int32, (sum_t_pad, tb), 0)

    sel = jnp.zeros((sum_t_pad, tb), jnp.float32)      # {0,1} one-hot selector
    w_rows = []
    for grid_size, row_off in level_params:            # static unroll over levels
        gs = np.float32(grid_size)
        left_f = jnp.floor(x / gs)                     # (1, tb), integral f32
        gmin = left_f * gs                             # grid_min_vertex
        gmax = gmin + gs                               # grid_max_vertex
        w = (x - gmin) / (gmax - gmin)                 # lerp weight, (1, tb)
        i0 = left_f.astype(jnp.int32) + np.int32(row_off)
        # 1 compare + 1 select per level on the (sum_t_pad, tb) tile; level row
        # blocks are disjoint, so later levels never overwrite earlier ones.
        sel = jnp.where(row_iota == i0, jnp.float32(1.0), sel)
        # Per-level lerp weight, broadcast across that level's feature rows.
        w_rows.append(jnp.broadcast_to(w, (n_feat, tb)))
    w_mat = jnp.concatenate(w_rows, axis=0)            # (out_dim, tb)

    # Single MXU matmul gathers both T[i0] and D[i0] = T[i0+1]-T[i0] for every
    # level at once: (2*out_dim, sum_t_pad) @ (sum_t_pad, tb).  The selector is
    # an exact {0,1} one-hot, and HIGHEST precision keeps the gather bit-exact f32.
    gathered = jnp.dot(tbl_ref[...], sel,
                       preferred_element_type=jnp.float32,
                       precision=jax.lax.Precision.HIGHEST)
    base = gathered[:out_dim]                          # T[i0]      (out_dim, tb)
    diff = gathered[out_dim:]                          # T[i1]-T[i0](out_dim, tb)

    # Lerp epilogue on the tiny (out_dim, tb) slab; lane-dense full-width store.
    out_ref[...] = (base + w_mat * diff).astype(out_ref.dtype)


def hash_embedder_1d_forward(x, tables, *, img_size, n_levels,
                             n_features_per_level, log2_hashmap_size,
                             base_resolution, finest_resolution,
                             block_b=1024, lane_major_output=False,
                             core_parallel=False):
    """Pallas forward. x: (B, 1) f32 in [0, img_size].

    Returns (B, n_levels*F), or the lane-dense (n_levels*F, B) layout when
    lane_major_output=True (skips the wrapper transpose; preferred for fusion
    with downstream consumers).  Set core_parallel=True on v7x to shard the
    batch grid axis across both TensorCores.
    """
    meta = _level_metadata(img_size, n_levels, log2_hashmap_size,
                           base_resolution, finest_resolution)
    B = x.shape[0]
    F = n_features_per_level
    out_dim = n_levels * F
    mask = (1 << log2_hashmap_size) - 1

    # ---- Static per-level row layout of the fused block-diagonal table. ----
    level_params = []          # (grid_size, row_offset) per level
    sliced = []                # (row_offset, sliced_table) per level
    row_off = 0
    for m, t in zip(meta, tables):
        res = m["resolution"]
        if m["use_mask"] and res + 1 > mask:
            # TODO(synk): true hash wrap-around (resolution >= 2**log2_hashmap_size)
            # needs an in-kernel DMA gather over the full table; never hit by
            # the module's default configs.
            raise NotImplementedError("hash wrap-around levels not supported")
        # Only rows [0, resolution+1] are addressable for x in [0, img_size];
        # for 1-D coords hash() is `idx * 1 & mask`, i.e. identity here.
        rows = min(t.shape[0], res + 2)
        level_params.append((m["grid_size"], row_off))
        sliced.append((row_off, t[:rows].astype(jnp.float32)))
        row_off += rows
    sum_t = row_off
    sum_t_pad = ((sum_t + 7) // 8) * 8    # sublane-align only (block == full array)

    # Stacked block-diagonal table: left out_dim columns hold T, right out_dim
    # columns hold D[r] = T[r+1] - T[r], so a single one-hot gather at i0
    # fetches both the base embedding and the finite difference for the lerp.
    fused = jnp.zeros((sum_t_pad, 2 * out_dim), jnp.float32)
    for lvl, (off, tl) in enumerate(sliced):
        rows = tl.shape[0]
        d = jnp.zeros_like(tl).at[:rows - 1].set(tl[1:] - tl[:-1])
        fused = fused.at[off:off + rows, lvl * F:(lvl + 1) * F].set(tl)
        fused = fused.at[off:off + rows,
                         out_dim + lvl * F:out_dim + (lvl + 1) * F].set(d)
    fused_t = fused.T                                   # (2*out_dim, sum_t_pad)

    # ---- Lane-dense layout: batch on the lane axis; pad B to the tile size. ----
    b_pad = ((B + block_b - 1) // block_b) * block_b
    x_row = x[:, 0].astype(jnp.float32)
    if b_pad != B:
        x_row = jnp.pad(x_row, (0, b_pad - B))
    x_lane = x_row.reshape(1, b_pad)

    kernel = functools.partial(_fused_hash_embed_kernel,
                               level_params=tuple(level_params),
                               sum_t_pad=sum_t_pad, out_dim=out_dim, n_feat=F)

    batch_sem = pltpu.CORE_PARALLEL if core_parallel else "parallel"

    out_t = pl.pallas_call(
        kernel,
        out_shape=jax.ShapeDtypeStruct((out_dim, b_pad), jnp.float32),
        grid_spec=pltpu.PrefetchScalarGridSpec(
            num_scalar_prefetch=0,
            grid=(b_pad // block_b,),
            in_specs=[
                pl.BlockSpec((1, block_b), lambda i: (0, i)),
                # Grid-invariant fused table; only 2*out_dim*sum_t_pad*4 bytes
                # (~3 KiB for the default config), so double buffering is free.
                pl.BlockSpec((2 * out_dim, sum_t_pad), lambda i: (0, 0)),
            ],
            out_specs=pl.BlockSpec((out_dim, block_b), lambda i: (0, i)),
        ),
        compiler_params=pltpu.CompilerParams(
            dimension_semantics=(batch_sem,),
            vmem_limit_bytes=32 * 1024 * 1024),
    )(x_lane, fused_t)

    if lane_major_output:
        return out_t[:, :B]                             # (out_dim, B), lane-dense
    return out_t.T[:B]                                  # (B, out_dim)


def hash_embedder_1d_reference(x, tables, *, img_size, n_levels,
                               n_features_per_level, log2_hashmap_size,
                               base_resolution, finest_resolution):
    """Pure-JAX reference mirroring the PyTorch forward pass."""
    meta = _level_metadata(img_size, n_levels, log2_hashmap_size,
                           base_resolution, finest_resolution)
    mask = (1 << log2_hashmap_size) - 1
    outs = []
    for m, t in zip(meta, tables):
        gs = np.float32(m["grid_size"])
        left_f = jnp.floor(x / gs)                      # (B, 1)
        gmin = left_f * gs
        gmax = gmin + gs
        w = (x - gmin) / (gmax - gmin)                  # (B, 1)
        idx0 = left_f.astype(jnp.int32)[:, 0]
        idx1 = idx0 + 1
        if m["use_mask"]:
            idx0 = idx0 & mask
            idx1 = idx1 & mask
        e0 = t[idx0]                                    # (B, F)
        e1 = t[idx1]
        outs.append(e0 * (1.0 - w) + e1 * w)
    return jnp.concatenate(outs, axis=-1)


if __name__ == "__main__":
    def run_case(*, img_size, n_levels, n_features_per_level, log2_hashmap_size,
                 base_resolution, finest_resolution, B, block_b,
                 check_lane_major=False):
        meta = _level_metadata(img_size, n_levels, log2_hashmap_size,
                               base_resolution, finest_resolution)
        key = jax.random.PRNGKey(0)
        k_x, *k_tabs = jax.random.split(key, n_levels + 1)
        x = jax.random.uniform(k_x, (B, 1), dtype=jnp.float32,
                               minval=0.0, maxval=float(img_size))
        # nn.init.uniform_(weight, a=-1e-4, b=1e-4), deterministic per level.
        tables = [
            jax.random.uniform(kt, (m["table_size"], n_features_per_level),
                               dtype=jnp.float32, minval=-1e-4, maxval=1e-4)
            for kt, m in zip(k_tabs, meta)
        ]
        common = dict(img_size=img_size, n_levels=n_levels,
                      n_features_per_level=n_features_per_level,
                      log2_hashmap_size=log2_hashmap_size,
                      base_resolution=base_resolution,
                      finest_resolution=finest_resolution)
        out = hash_embedder_1d_forward(x, tables, block_b=block_b, **common)
        out = jax.block_until_ready(out)
        ref = hash_embedder_1d_reference(x, tables, **common)
        np.testing.assert_allclose(np.asarray(out), np.asarray(ref),
                                   rtol=1e-5, atol=1e-7)
        assert out.shape == (B, n_levels * n_features_per_level)
        if check_lane_major:
            out_lm = hash_embedder_1d_forward(x, tables, block_b=block_b,
                                              lane_major_output=True, **common)
            out_lm = jax.block_until_ready(out_lm)
            np.testing.assert_allclose(np.asarray(out_lm).T, np.asarray(ref),
                                       rtol=1e-5, atol=1e-7)

    # Case 1: all one2one levels; 4 tiles of 1024 (grid multiple of 2 so both
    # v7x TensorCores get work when core_parallel is enabled).  Also checks the
    # transpose-free lane-major output path.
    run_case(img_size=64, n_levels=4, n_features_per_level=2,
             log2_hashmap_size=19, base_resolution=4, finest_resolution=16,
             B=4096, block_b=1024, check_lane_major=True)

    # Case 2: small hashmap so two levels take the hashed (use_mask) branch,
    # plus a batch that is not a multiple of block_b (exercises padding) and
    # still a 2-tile grid.
    run_case(img_size=64, n_levels=4, n_features_per_level=2,
             log2_hashmap_size=6, base_resolution=4, finest_resolution=16,
             B=777, block_b=512)

    print("KERNEL_OK")
</pallas_src>

<mosaic_0001>
module attributes {stable_mosaic.version = 11 : i64} {
  func.func @_fused_hash_embed_kernel(%arg0: i32, %arg1: memref<1x1024xf32, #tpu.memory_space<vmem>>, %arg2: memref<16x48xf32, #tpu.memory_space<vmem>>, %arg3: memref<8x1024xf32, #tpu.memory_space<vmem>>) attributes {dimension_semantics = [#tpu.dimension_semantics<parallel>], iteration_bounds = array<i64: 4>, scalar_prefetch = 0 : i64, scratch_operands = 0 : i64, tpu.core_type = #tpu.core_type<tc>, window_params = [{transform_indices = @transform_0, window_bounds = array<i64: 1, 1024>}, {pipeline_mode = #tpu.pipeline_mode<synchronous>, transform_indices = @transform_1, window_bounds = array<i64: 16, 48>}, {transform_indices = @transform_2, window_bounds = array<i64: 8, 1024>}]} {
    %c0 = arith.constant 0 : index
    %c0_0 = arith.constant 0 : index
    %0 = vector.load %arg1[%c0, %c0_0] : memref<1x1024xf32, #tpu.memory_space<vmem>>, vector<1x1024xf32>
    %1 = tpu.iota {dimensions = array<i32: 0>} : vector<48x1024xi32>
    %cst = arith.constant 0.000000e+00 : f32
    %2 = vector.broadcast %cst : f32 to vector<48x1024xf32>
    %cst_1 = arith.constant 1.600000e+01 : f32
    %3 = vector.broadcast %cst_1 : f32 to vector<1x1024xf32>
    %4 = arith.divf %0, %3 : vector<1x1024xf32>
    %5 = math.floor %4 : vector<1x1024xf32>
    %cst_2 = arith.constant 1.600000e+01 : f32
    %6 = vector.broadcast %cst_2 : f32 to vector<1x1024xf32>
    %7 = arith.mulf %5, %6 : vector<1x1024xf32>
    %cst_3 = arith.constant 1.600000e+01 : f32
    %8 = vector.broadcast %cst_3 : f32 to vector<1x1024xf32>
    %9 = arith.addf %7, %8 : vector<1x1024xf32>
    %10 = arith.subf %0, %7 : vector<1x1024xf32>
    %11 = arith.subf %9, %7 : vector<1x1024xf32>
    %12 = arith.divf %10, %11 : vector<1x1024xf32>
    %13 = arith.fptosi %5 : vector<1x1024xf32> to vector<1x1024xi32>
    %c0_i32 = arith.constant 0 : i32
    %14 = vector.broadcast %c0_i32 : i32 to vector<1x1024xi32>
    %15 = arith.addi %13, %14 : vector<1x1024xi32>
    %16 = vector.broadcast %15 : vector<1x1024xi32> to vector<48x1024xi32>
    %17 = arith.cmpi eq, %1, %16 : vector<48x1024xi32>
    %cst_4 = arith.constant 1.000000e+00 : f32
    %18 = vector.broadcast %cst_4 : f32 to vector<48x1024xf32>
    %19 = arith.select %17, %18, %2 : vector<48x1024xi1>, vector<48x1024xf32>
    %20 = vector.shape_cast %12 : vector<1x1024xf32> to vector<1x1024xf32>
    %21 = vector.broadcast %20 : vector<1x1024xf32> to vector<2x1024xf32>
    %cst_5 = arith.constant 10.666667 : f32
    %22 = vector.broadcast %cst_5 : f32 to vector<1x1024xf32>
    %23 = arith.divf %0, %22 : vector<1x1024xf32>
    %24 = math.floor %23 : vector<1x1024xf32>
    %cst_6 = arith.constant 10.666667 : f32
    %25 = vector.broadcast %cst_6 : f32 to vector<1x1024xf32>
    %26 = arith.mulf %24, %25 : vector<1x1024xf32>
    %cst_7 = arith.constant 10.666667 : f32
    %27 = vector.broadcast %cst_7 : f32 to vector<1x1024xf32>
    %28 = arith.addf %26, %27 : vector<1x1024xf32>
    %29 = arith.subf %0, %26 : vector<1x1024xf32>
    %30 = arith.subf %28, %26 : vector<1x1024xf32>
    %31 = arith.divf %29, %30 : vector<1x1024xf32>
    %32 = arith.fptosi %24 : vector<1x1024xf32> to vector<1x1024xi32>
    %c6_i32 = arith.constant 6 : i32
    %33 = vector.broadcast %c6_i32 : i32 to vector<1x1024xi32>
    %34 = arith.addi %32, %33 : vector<1x1024xi32>
    %35 = vector.broadcast %34 : vector<1x1024xi32> to vector<48x1024xi32>
    %36 = arith.cmpi eq, %1, %35 : vector<48x1024xi32>
    %cst_8 = arith.constant 1.000000e+00 : f32
    %37 = vector.broadcast %cst_8 : f32 to vector<48x1024xf32>
    %38 = arith.select %36, %37, %19 : vector<48x1024xi1>, vector<48x1024xf32>
    %39 = vector.shape_cast %31 : vector<1x1024xf32> to vector<1x1024xf32>
    %40 = vector.broadcast %39 : vector<1x1024xf32> to vector<2x1024xf32>
    %cst_9 = arith.constant 6.400000e+00 : f32
    %41 = vector.broadcast %cst_9 : f32 to vector<1x1024xf32>
    %42 = arith.divf %0, %41 : vector<1x1024xf32>
    %43 = math.floor %42 : vector<1x1024xf32>
    %cst_10 = arith.constant 6.400000e+00 : f32
    %44 = vector.broadcast %cst_10 : f32 to vector<1x1024xf32>
    %45 = arith.mulf %43, %44 : vector<1x1024xf32>
    %cst_11 = arith.constant 6.400000e+00 : f32
    %46 = vector.broadcast %cst_11 : f32 to vector<1x1024xf32>
    %47 = arith.addf %45, %46 : vector<1x1024xf32>
    %48 = arith.subf %0, %45 : vector<1x1024xf32>
    %49 = arith.subf %47, %45 : vector<1x1024xf32>
    %50 = arith.divf %48, %49 : vector<1x1024xf32>
    %51 = arith.fptosi %43 : vector<1x1024xf32> to vector<1x1024xi32>
    %c14_i32 = arith.constant 14 : i32
    %52 = vector.broadcast %c14_i32 : i32 to vector<1x1024xi32>
    %53 = arith.addi %51, %52 : vector<1x1024xi32>
    %54 = vector.broadcast %53 : vector<1x1024xi32> to vector<48x1024xi32>
    %55 = arith.cmpi eq, %1, %54 : vector<48x1024xi32>
    %cst_12 = arith.constant 1.000000e+00 : f32
    %56 = vector.broadcast %cst_12 : f32 to vector<48x1024xf32>
    %57 = arith.select %55, %56, %38 : vector<48x1024xi1>, vector<48x1024xf32>
    %58 = vector.shape_cast %50 : vector<1x1024xf32> to vector<1x1024xf32>
    %59 = vector.broadcast %58 : vector<1x1024xf32> to vector<2x1024xf32>
    %cst_13 = arith.constant 4.26666689 : f32
    %60 = vector.broadcast %cst_13 : f32 to vector<1x1024xf32>
    %61 = arith.divf %0, %60 : vector<1x1024xf32>
    %62 = math.floor %61 : vector<1x1024xf32>
    %cst_14 = arith.constant 4.26666689 : f32
    %63 = vector.broadcast %cst_14 : f32 to vector<1x1024xf32>
    %64 = arith.mulf %62, %63 : vector<1x1024xf32>
    %cst_15 = arith.constant 4.26666689 : f32
    %65 = vector.broadcast %cst_15 : f32 to vector<1x1024xf32>
    %66 = arith.addf %64, %65 : vector<1x1024xf32>
    %67 = arith.subf %0, %64 : vector<1x1024xf32>
    %68 = arith.subf %66, %64 : vector<1x1024xf32>
    %69 = arith.divf %67, %68 : vector<1x1024xf32>
    %70 = arith.fptosi %62 : vector<1x1024xf32> to vector<1x1024xi32>
    %c26_i32 = arith.constant 26 : i32
    %71 = vector.broadcast %c26_i32 : i32 to vector<1x1024xi32>
    %72 = arith.addi %70, %71 : vector<1x1024xi32>
    %73 = vector.broadcast %72 : vector<1x1024xi32> to vector<48x1024xi32>
    %74 = arith.cmpi eq, %1, %73 : vector<48x1024xi32>
    %cst_16 = arith.constant 1.000000e+00 : f32
    %75 = vector.broadcast %cst_16 : f32 to vector<48x1024xf32>
    %76 = arith.select %74, %75, %57 : vector<48x1024xi1>, vector<48x1024xf32>
    %77 = vector.shape_cast %69 : vector<1x1024xf32> to vector<1x1024xf32>
    %78 = vector.broadcast %77 : vector<1x1024xf32> to vector<2x1024xf32>
    %79 = tpu.concatenate %21, %40, %59, %78 in 0 : vector<2x1024xf32>, vector<2x1024xf32>, vector<2x1024xf32>, vector<2x1024xf32> -> vector<8x1024xf32>
    %c0_17 = arith.constant 0 : index
    %c0_18 = arith.constant 0 : index
    %80 = vector.load %arg2[%c0_17, %c0_18] : memref<16x48xf32, #tpu.memory_space<vmem>>, vector<16x48xf32>
    %cst_19 = arith.constant dense<0.000000e+00> : vector<16x1024xf32>
    %81 = tpu.matmul %80, %76, %cst_19 {dimension_numbers = #tpu.dot_dimension_numbers<[1], [0], [0], [1], [0, 0, 1, 1], [], []>, precision = #tpu.contract_precision<fp32>} : vector<16x48xf32>, vector<48x1024xf32>, vector<16x1024xf32> -> vector<16x1024xf32>
    %82 = vector.extract_strided_slice %81 {offsets = [0, 0], sizes = [8, 1024], strides = [1, 1]} : vector<16x1024xf32> to vector<8x1024xf32>
    %83 = vector.extract_strided_slice %81 {offsets = [8, 0], sizes = [8, 1024], strides = [1, 1]} : vector<16x1024xf32> to vector<8x1024xf32>
    %84 = arith.mulf %79, %83 : vector<8x1024xf32>
    %85 = arith.addf %82, %84 : vector<8x1024xf32>
    %c0_20 = arith.constant 0 : index
    %c0_21 = arith.constant 0 : index
    %86 = vector.load %arg3[%c0_20, %c0_21] : memref<8x1024xf32, #tpu.memory_space<vmem>>, vector<8x1024xf32>
    tpu.vector_store %arg3[%c0_20, %c0_21], %85 {strides = array<i32>} : memref<8x1024xf32, #tpu.memory_space<vmem>>, vector<8x1024xf32>,
    return
  }
  func.func @transform_0(%arg0: i32) -> (i32, i32) {
    %c0_i32 = arith.constant 0 : i32
    %c0_i32_0 = arith.constant 0 : i32
    return %c0_i32, %arg0 : i32, i32
  }
  func.func @transform_1(%arg0: i32) -> (i32, i32) {
    %c0_i32 = arith.constant 0 : i32
    %c0_i32_0 = arith.constant 0 : i32
    %c0_i32_1 = arith.constant 0 : i32
    return %c0_i32, %c0_i32_0 : i32, i32
  }
  func.func @transform_2(%arg0: i32) -> (i32, i32) {
    %c0_i32 = arith.constant 0 : i32
    %c0_i32_0 = arith.constant 0 : i32
    return %c0_i32, %arg0 : i32, i32
  }
}

</mosaic_0001>

<llo_original>
// kernel: tpu_custom_call.1
$region0: #{tpu_custom_call.1}
  #allocation0 [shape = 'u32[]', space=smem, size = 0x4, offset = 0x4, fixed_abs, tag = 'smem constant byte address 0x4 - core index']
  #allocation1 [shape = 'u32[72,128]{1,0:T(1,128)}', space=vmem, size = 0x9000, scoped, tag = 'internal scratch']
  %s0 = inlined_call_operand.hbm [shape: f32[1,4096], index: 0, kind: input, shape index: {}]
  %s1 = inlined_call_operand.hbm [shape: f32[16,48], index: 1, kind: input, shape index: {}]
  %s2 = inlined_call_operand.hbm [shape: f32[8,4096], index: 2, kind: output, shape index: {}]
  %s3 = sld [smem:[#allocation0]]
  $region49: #{tpu_custom_call.1} parent=0
    _
  %s5 = ssub.s32 1, %s3
  %s6 = scalar_select 0, %s5, %s3
  $region1: #{tpu_custom_call.1} parent=0
    #allocation2 [shape = 'u8[8192]{0}', space=vmem, size = 0x2000, scoped, tag = 'input window, operand 0']
    #allocation3 [shape = 's32[2]{0}', space=sflag, size = 0x8, scoped, tag = 'scoped memory for tpu_custom_call.1']
    #allocation4 [shape = 's32[2]{0}', space=sflag, size = 0x8, scoped, tag = 'scoped memory for tpu_custom_call.1']
    #allocation5 [shape = 'u8[8192]{0}', space=vmem, size = 0x2000, scoped, tag = 'input window, operand 1, single buffered']
    #allocation6 [shape = 's32[1]{0}', space=sflag, size = 0x4, scoped, tag = 'scoped memory for tpu_custom_call.1']
    #allocation7 [shape = 'u8[65536]{0}', space=vmem, size = 0x10000, scoped, tag = 'output window, operand 0']
    %7 = vsyncpa [#allocation3], 0
    %s8 = scalar_lea.sflag [#allocation3], 1
    %9 = vsyncpa %s8, 0
    %10 = vsyncpa [#allocation6], 0
    %11 = vsyncpa [#allocation4], 0
    %s12 = scalar_lea.sflag [#allocation4], 1
    %13 = vsyncpa %s12, 0
    loop: start=0, step=1, limit=6
    $region2: #{tpu_custom_call.1} parent=1 // loop_pre_header
      _
    $region3: #{tpu_custom_call.1} parent=1 // loop_header
      %s15 = sphi 0, %s19
      %p16 = scmp.ge.s32.totalorder %s15, 6
      %s25 = sphi 0, %s27
      %s28 = sphi 0, %s25
      %s29 = sphi 0, %s28
      %s45 = sphi 0, %s29
      %s49 = sphi 0, %s49
      %s51 = sphi 0, %s49
      %s52 = sphi 0, %s51
      %s66 = sphi 0, %s52
      %s72 = sphi 0, %s74
      %s75 = sphi 0, %s72
      %s76 = sphi 0, %s75
      %s92 = sphi 0, %s76
    $region4: #{tpu_custom_call.1} parent=1 // loop_header_branch
      %18 = sbr.rel (%p16) target = $region8
    $region5: #{tpu_custom_call.1} parent=1 // loop_body
      %s20 = ssub.s32 %s15, 1
      %s21 = ssub.s32 %s15, 2
      %s22 = sadd.s32 %s15, 1
      %s23 = ssub.s32 %s15, %s22
      %p24 = scmp.eq.s32.totalorder %s23, 0
      %s26 = sadd.s32 %s25, 1
      %s27 = scalar_select %p24, %s25, %s26
      %p30 = pneg %p24
      %p31 = scmp.eq.s32.totalorder %s15, 3
      %p32 = por %p30, %p31
      %p33 = scmp.ne.s32.totalorder %s25, %s28
      %p34 = scmp.eq.s32.totalorder %s15, 0
      %p35 = por %p33, %p34
      %p36 = scmp.ne.s32.totalorder %s25, %s28
      %p37 = scmp.eq.s32.totalorder %s20, 3
      %p38 = por %p36, %p37
      %p39 = scmp.ne.s32.totalorder %s28, %s29
      %p40 = scmp.eq.s32.totalorder %s20, 0
      %p41 = por %p39, %p40
      %p42 = scmp.ne.s32.totalorder %s28, %s29
      %p43 = scmp.eq.s32.totalorder %s21, 3
      %p44 = por %p42, %p43
      %p46 = scmp.ne.s32.totalorder %s29, %s45
      %p47 = scmp.eq.s32.totalorder %s21, 0
      %p48 = por %p46, %p47
      %s50 = sadd.s32 %s49, 1
      %p53 = scmp.eq.s32.totalorder %s15, 3
      %p54 = scmp.ne.s32.totalorder %s49, %s51
      %p55 = scmp.eq.s32.totalorder %s15, 0
      %p56 = por %p54, %p55
      %p57 = scmp.ne.s32.totalorder %s49, %s51
      %p58 = scmp.eq.s32.totalorder %s20, 3
      %p59 = por %p57, %p58
      %p60 = scmp.ne.s32.totalorder %s51, %s52
      %p61 = scmp.eq.s32.totalorder %s20, 0
      %p62 = por %p60, %p61
      %p63 = scmp.ne.s32.totalorder %s51, %s52
      %p64 = scmp.eq.s32.totalorder %s21, 3
      %p65 = por %p63, %p64
      %p67 = scmp.ne.s32.totalorder %s52, %s66
      %p68 = scmp.eq.s32.totalorder %s21, 0
      %p69 = por %p67, %p68
      %s70 = ssub.s32 %s15, %s22
      %p71 = scmp.eq.s32.totalorder %s70, 0
      %s73 = sadd.s32 %s72, 1
      %s74 = scalar_select %p71, %s72, %s73
      %p77 = pneg %p71
      %p78 = scmp.eq.s32.totalorder %s15, 3
      %p79 = por %p77, %p78
      %p80 = scmp.ne.s32.totalorder %s72, %s75
      %p81 = scmp.eq.s32.totalorder %s15, 0
      %p82 = por %p80, %p81
      %p83 = scmp.ne.s32.totalorder %s72, %s75
      %p84 = scmp.eq.s32.totalorder %s20, 3
      %p85 = por %p83, %p84
      %p86 = scmp.ne.s32.totalorder %s75, %s76
      %p87 = scmp.eq.s32.totalorder %s20, 0
      %p88 = por %p86, %p87
      %p89 = scmp.ne.s32.totalorder %s75, %s76
      %p90 = scmp.eq.s32.totalorder %s21, 3
      %p91 = por %p89, %p90
      %p93 = scmp.ne.s32.totalorder %s76, %s92
      %p94 = scmp.eq.s32.totalorder %s21, 0
      %p95 = por %p93, %p94
      %p96 = scmp.le.s32.totalorder 1, %s15
      %p97 = scmp.lt.s32.totalorder %s15, 5
      %p98 = pnand %p96, %p97
      %p99 = pneg %p98
      // Predicated region
      $region9: #{tpu_custom_call.1} parent=5 // pred_check
        _
      $region10: #{tpu_custom_call.1} parent=5 // pred_check_branch
        %101 = sbr.rel (%p98) target = $region12
      $region11: #{tpu_custom_call.1} parent=5 // pred_region
        %s102 = ssub.s32 %s15, 1
        // Predicated region
        $region13: #{tpu_custom_call.1} parent=11 // pred_check
          %p103 = pneg %p62
        $region14: #{tpu_custom_call.1} parent=11 // pred_check_branch
          %105 = sbr.rel (%p103) target = $region16
        $region15: #{tpu_custom_call.1} parent=11 // pred_region
          %107 = vsyncadd [#allocation6], 0
          %s108 = sshll.u32 %s1, 4
          %s109 = int_to_ptr.hbm [resolvable:$true] %s108
          %s110 = sshll.u32 [#allocation5], 4
          %s111 = int_to_ptr.vmem [resolvable:$true] %s110
          %116 = dma.hbm_to_vmem [thread:$0]  %s109, 256, %s111, [#allocation6], 128, 128, 8
        $region16: #{tpu_custom_call.1} parent=11 // pred_fallthru
          _
      $region12: #{tpu_custom_call.1} parent=5 // pred_fallthru
        _
      %p117 = scmp.lt.s32.totalorder %s15, 4
      // Predicated region
      $region17: #{tpu_custom_call.1} parent=5 // pred_check
        %p118 = pneg %p117
      $region18: #{tpu_custom_call.1} parent=5 // pred_check_branch
        %120 = sbr.rel (%p118) target = $region20
      $region19: #{tpu_custom_call.1} parent=5 // pred_region
        // Predicated region
        $region21: #{tpu_custom_call.1} parent=19 // pred_check
          %p121 = pneg %p35
        $region22: #{tpu_custom_call.1} parent=19 // pred_check_branch
          %123 = sbr.rel (%p121) target = $region24
        $region23: #{tpu_custom_call.1} parent=19 // pred_region
          %s124 = sand.u32 %s25, 1
          %s125 = scalar_lea.sflag [#allocation3], %s124
          %s126 = sand.u32 %s25, 1
          %s127 = smul.addr %s126, 8
          %s128 = scalar_lea.vmem [#allocation2], %s127
          %s129 = smul.u32 8, %s15
          %131 = vsyncadd %s125, 0
          %s132 = scalar_lea.hbm %s0, %s129
          %s134 = sshll.u32 %s132, 4
          %s135 = int_to_ptr.hbm [resolvable:$true] %s134
          %s136 = sshll.u32 %s128, 4
          %s137 = int_to_ptr.vmem [resolvable:$true] %s136
          %139 = dma.hbm_to_vmem [thread:$0]  %s135, 128, %s137, %s125
        $region24: #{tpu_custom_call.1} parent=19 // pred_fallthru
          _
      $region20: #{tpu_custom_call.1} parent=5 // pred_fallthru
        _
      %p140 = scmp.le.s32.totalorder 1, %s15
      %p141 = scmp.lt.s32.totalorder %s15, 5
      %p142 = pnand %p140, %p141
      %p143 = pneg %p142
      // Predicated region
      $region25: #{tpu_custom_call.1} parent=5 // pred_check
        _
      $region26: #{tpu_custom_call.1} parent=5 // pred_check_branch
        %145 = sbr.rel (%p142) target = $region28
      $region27: #{tpu_custom_call.1} parent=5 // pred_region
        %s146 = ssub.s32 %s15, 1
        %s147 = sand.u32 %s28, 1
        %s148 = scalar_lea.sflag [#allocation3], %s147
        %s149 = sand.u32 %s28, 1
        %s150 = smul.addr %s149, 8
        %s151 = scalar_lea.vmem [#allocation2], %s150
        // Predicated region
        $region29: #{tpu_custom_call.1} parent=27 // pred_check
          %p152 = pneg %p41
        $region30: #{tpu_custom_call.1} parent=27 // pred_check_branch
          %154 = sbr.rel (%p152) target = $region32
        $region31: #{tpu_custom_call.1} parent=27 // pred_region
          %156 = dma.done %s148, 128
        $region32: #{tpu_custom_call.1} parent=27 // pred_fallthru
          _
        // Predicated region
        $region33: #{tpu_custom_call.1} parent=27 // pred_check
          %p157 = pneg %p62
        $region34: #{tpu_custom_call.1} parent=27 // pred_check_branch
          %159 = sbr.rel (%p157) target = $region36
        $region35: #{tpu_custom_call.1} parent=27 // pred_region
          %161 = dma.done [#allocation6], 256
        $region36: #{tpu_custom_call.1} parent=27 // pred_fallthru
          _
        %s162 = sand.u32 %s28, 1
        %s163 = scalar_lea.sflag [#allocation3], %s162
        %s164 = sand.u32 %s28, 1
        %s165 = smul.addr %s164, 8
        %s166 = scalar_lea.vmem [#allocation2], %s165
        %p167 = pneg %p41
        %p168 = pneg %p38
        %p169 = pneg %p62
        %p170 = pneg %p59
        %p171 = pneg %p88
        %p172 = pneg %p85
        %s173 = sand.u32 %s75, 1
        %s174 = scalar_lea.sflag [#allocation4], %s173
        %s175 = sand.u32 %s75, 1
        %s176 = smul.addr %s175, 64
        %s177 = scalar_lea.vmem [#allocation7], %s176
        %s178 = smul.u32 8, %s20
        %s179 = smul.u32 8, %s20
        %v180 = vld [vmem:[%s151] sm:$0xff]
        %v181 = vlaneseq
        %v182 = vshrl.u32 %v181, 7
        %v183 = vadd.s32 %v182, 8
        %v184 = vadd.s32 %v182, 16
        %v185 = vadd.s32 %v182, 24
        %v186 = vadd.s32 %v182, 32
        %v187 = vadd.s32 %v182, 40
        %v188 = vrcp.pop 16.0
        %v189 = vmul.f32 16.0, %v188
        %v190 = vsub.f32 1.0, %v189
        %v191 = vmul.f32 %v188, %v190
        %v192 = vadd.f32 %v188, %v191
        %vm193 = vweird.f32 %v188
        %v194 = vsel %vm193, %v188, %v192
        %v195 = vmul.f32 %v180, %v194
        %v196 = vfloor.f32 %v195
        %v197 = vmul.f32 %v196, 16.0
        %v198 = vadd.f32 %v197, 16.0
        %v199 = vsub.f32 %v180, %v197
        %v200 = vsub.f32 %v198, %v197
        %v201 = vrcp.pop %v200
        %v202 = vmul.f32 %v200, %v201
        %v203 = vsub.f32 1.0, %v202
        %v204 = vmul.f32 %v201, %v203
        %v205 = vadd.f32 %v201, %v204
        %vm206 = vweird.f32 %v200
        %vm207 = vweird.f32 %v201
        %vm208 = vmor %vm206, %vm207
        %v209 = vsel %vm208, %v201, %v205
        %v210 = vand.u32 2147483647, %v200
        %vm211 = vcmp.eq.f32.partialorder %v210, 8.507059e+37
        %v212 = vand.u32 %v200, 2147483648
        %v213 = vor.u32 1.1754944e-38, %v212
        %v214 = vsel %vm211, %v213, %v209
        %v215 = vmul.f32 %v199, %v214
        %v216 = vcvt.f32.s32.to.zero.pseudo %v196
        %v217 = vperm.slane %v216, 0
        %v218 = vperm.slane %v216, 1
        %v219 = vperm.slane %v216, 2
        %v220 = vperm.slane %v216, 3
        %v221 = vperm.slane %v216, 4
        %v222 = vperm.slane %v216, 5
        %v223 = vperm.slane %v216, 6
        %v224 = vperm.slane %v216, 7
        %vm225 = vcmp.eq.s32.totalorder %v182, %v217
        %vm226 = vcmp.eq.s32.totalorder %v182, %v218
        %vm227 = vcmp.eq.s32.totalorder %v182, %v219
        %vm228 = vcmp.eq.s32.totalorder %v182, %v220
        %vm229 = vcmp.eq.s32.totalorder %v182, %v221
        %vm230 = vcmp.eq.s32.totalorder %v182, %v222
        %vm231 = vcmp.eq.s32.totalorder %v182, %v223
        %vm232 = vcmp.eq.s32.totalorder %v182, %v224
        %vm233 = vcmp.eq.s32.totalorder %v183, %v217
        %vm234 = vcmp.eq.s32.totalorder %v183, %v218
        %vm235 = vcmp.eq.s32.totalorder %v183, %v219
        %vm236 = vcmp.eq.s32.totalorder %v183, %v220
        %vm237 = vcmp.eq.s32.totalorder %v183, %v221
        %vm238 = vcmp.eq.s32.totalorder %v183, %v222
        %vm239 = vcmp.eq.s32.totalorder %v183, %v223
        %vm240 = vcmp.eq.s32.totalorder %v183, %v224
        %vm241 = vcmp.eq.s32.totalorder %v184, %v217
        %vm242 = vcmp.eq.s32.totalorder %v184, %v218
        %vm243 = vcmp.eq.s32.totalorder %v184, %v219
        %vm244 = vcmp.eq.s32.totalorder %v184, %v220
        %vm245 = vcmp.eq.s32.totalorder %v184, %v221
        %vm246 = vcmp.eq.s32.totalorder %v184, %v222
        %vm247 = vcmp.eq.s32.totalorder %v184, %v223
        %vm248 = vcmp.eq.s32.totalorder %v184, %v224
        %vm249 = vcmp.eq.s32.totalorder %v185, %v217
        %vm250 = vcmp.eq.s32.totalorder %v185, %v218
        %vm251 = vcmp.eq.s32.totalorder %v185, %v219
        %vm252 = vcmp.eq.s32.totalorder %v185, %v220
        %vm253 = vcmp.eq.s32.totalorder %v185, %v221
        %vm254 = vcmp.eq.s32.totalorder %v185, %v222
        %vm255 = vcmp.eq.s32.totalorder %v185, %v223
        %vm256 = vcmp.eq.s32.totalorder %v185, %v224
        %vm257 = vcmp.eq.s32.totalorder %v186, %v217
        %vm258 = vcmp.eq.s32.totalorder %v186, %v218
        %vm259 = vcmp.eq.s32.totalorder %v186, %v219
        %vm260 = vcmp.eq.s32.totalorder %v186, %v220
        %vm261 = vcmp.eq.s32.totalorder %v186, %v221
        %vm262 = vcmp.eq.s32.totalorder %v186, %v222
        %vm263 = vcmp.eq.s32.totalorder %v186, %v223
        %vm264 = vcmp.eq.s32.totalorder %v186, %v224
        %vm265 = vcmp.eq.s32.totalorder %v187, %v217
        %vm266 = vcmp.eq.s32.totalorder %v187, %v218
        %vm267 = vcmp.eq.s32.totalorder %v187, %v219
        %vm268 = vcmp.eq.s32.totalorder %v187, %v220
        %vm269 = vcmp.eq.s32.totalorder %v187, %v221
        %vm270 = vcmp.eq.s32.totalorder %v187, %v222
        %vm271 = vcmp.eq.s32.totalorder %v187, %v223
        %vm272 = vcmp.eq.s32.totalorder %v187, %v224
        %v273 = vsel %vm225, 1.0, 0.0
        %v274 = vsel %vm226, 1.0, 0.0
        %v275 = vsel %vm227, 1.0, 0.0
        %v276 = vsel %vm228, 1.0, 0.0
        %v277 = vsel %vm229, 1.0, 0.0
        %v278 = vsel %vm230, 1.0, 0.0
        %v279 = vsel %vm231, 1.0, 0.0
        %v280 = vsel %vm232, 1.0, 0.0
        %v281 = vsel %vm233, 1.0, 0.0
        %v282 = vsel %vm234, 1.0, 0.0
        %v283 = vsel %vm235, 1.0, 0.0
        %v284 = vsel %vm236, 1.0, 0.0
        %v285 = vsel %vm237, 1.0, 0.0
        %v286 = vsel %vm238, 1.0, 0.0
        %v287 = vsel %vm239, 1.0, 0.0
        %v288 = vsel %vm240, 1.0, 0.0
        %v289 = vsel %vm241, 1.0, 0.0
        %v290 = vsel %vm242, 1.0, 0.0
        %v291 = vsel %vm243, 1.0, 0.0
        %v292 = vsel %vm244, 1.0, 0.0
        %v293 = vsel %vm245, 1.0, 0.0
        %v294 = vsel %vm246, 1.0, 0.0
        %v295 = vsel %vm247, 1.0, 0.0
        %v296 = vsel %vm248, 1.0, 0.0
        %v297 = vsel %vm249, 1.0, 0.0
        %v298 = vsel %vm250, 1.0, 0.0
        %v299 = vsel %vm251, 1.0, 0.0
        %v300 = vsel %vm252, 1.0, 0.0
        %v301 = vsel %vm253, 1.0, 0.0
        %v302 = vsel %vm254, 1.0, 0.0
        %v303 = vsel %vm255, 1.0, 0.0
        %v304 = vsel %vm256, 1.0, 0.0
        %v305 = vsel %vm257, 1.0, 0.0
        %v306 = vsel %vm258, 1.0, 0.0
        %v307 = vsel %vm259, 1.0, 0.0
        %v308 = vsel %vm260, 1.0, 0.0
        %v309 = vsel %vm261, 1.0, 0.0
        %v310 = vsel %vm262, 1.0, 0.0
        %v311 = vsel %vm263, 1.0, 0.0
        %v312 = vsel %vm264, 1.0, 0.0
        %v313 = vsel %vm265, 1.0, 0.0
        %v314 = vsel %vm266, 1.0, 0.0
        %v315 = vsel %vm267, 1.0, 0.0
        %v316 = vsel %vm268, 1.0, 0.0
        %v317 = vsel %vm269, 1.0, 0.0
        %v318 = vsel %vm270, 1.0, 0.0
        %v319 = vsel %vm271, 1.0, 0.0
        %v320 = vsel %vm272, 1.0, 0.0
        %v322 = vperm.slane %v215, 0
        %v323 = vperm.slane %v215, 1
        %v324 = vperm.slane %v215, 2
        %v325 = vperm.slane %v215, 3
        %v326 = vperm.slane %v215, 4
        %v327 = vperm.slane %v215, 5
        %v328 = vperm.slane %v215, 6
        %v329 = vperm.slane %v215, 7
        %v338 = vrcp.pop 10.666667
        %v339 = vmul.f32 10.666667, %v338
        %v340 = vsub.f32 1.0, %v339
        %v341 = vmul.f32 %v338, %v340
        %v342 = vadd.f32 %v338, %v341
        %vm343 = vweird.f32 %v338
        %v344 = vsel %vm343, %v338, %v342
        %v345 = vmul.f32 %v180, %v344
        %v346 = vfloor.f32 %v345
        %v347 = vmul.f32 %v346, 10.666667
        %v348 = vadd.f32 %v347, 10.666667
        %v349 = vsub.f32 %v180, %v347
        %v350 = vsub.f32 %v348, %v347
        %v351 = vrcp.pop %v350
        %v352 = vmul.f32 %v350, %v351
        %v353 = vsub.f32 1.0, %v352
        %v354 = vmul.f32 %v351, %v353
        %v355 = vadd.f32 %v351, %v354
        %vm356 = vweird.f32 %v350
        %vm357 = vweird.f32 %v351
        %vm358 = vmor %vm356, %vm357
        %v359 = vsel %vm358, %v351, %v355
        %v360 = vand.u32 2147483647, %v350
        %vm361 = vcmp.eq.f32.partialorder %v360, 8.507059e+37
        %v362 = vand.u32 %v350, 2147483648
        %v363 = vor.u32 1.1754944e-38, %v362
        %v364 = vsel %vm361, %v363, %v359
        %v365 = vmul.f32 %v349, %v364
        %v366 = vcvt.f32.s32.to.zero.pseudo %v346
        %v367 = vadd.s32 %v366, 6
        %v368 = vperm.slane %v367, 0
        %v369 = vperm.slane %v367, 1
        %v370 = vperm.slane %v367, 2
        %v371 = vperm.slane %v367, 3
        %v372 = vperm.slane %v367, 4
        %v373 = vperm.slane %v367, 5
        %v374 = vperm.slane %v367, 6
        %v375 = vperm.slane %v367, 7
        %vm376 = vcmp.eq.s32.totalorder %v182, %v368
        %vm377 = vcmp.eq.s32.totalorder %v182, %v369
        %vm378 = vcmp.eq.s32.totalorder %v182, %v370
        %vm379 = vcmp.eq.s32.totalorder %v182, %v371
        %vm380 = vcmp.eq.s32.totalorder %v182, %v372
        %vm381 = vcmp.eq.s32.totalorder %v182, %v373
        %vm382 = vcmp.eq.s32.totalorder %v182, %v374
        %vm383 = vcmp.eq.s32.totalorder %v182, %v375
        %vm384 = vcmp.eq.s32.totalorder %v183, %v368
        %vm385 = vcmp.eq.s32.totalorder %v183, %v369
        %vm386 = vcmp.eq.s32.totalorder %v183, %v370
        %vm387 = vcmp.eq.s32.totalorder %v183, %v371
        %vm388 = vcmp.eq.s32.totalorder %v183, %v372
        %vm389 = vcmp.eq.s32.totalorder %v183, %v373
        %vm390 = vcmp.eq.s32.totalorder %v183, %v374
        %vm391 = vcmp.eq.s32.totalorder %v183, %v375
        %vm392 = vcmp.eq.s32.totalorder %v184, %v368
        %vm393 = vcmp.eq.s32.totalorder %v184, %v369
        %vm394 = vcmp.eq.s32.totalorder %v184, %v370
        %vm395 = vcmp.eq.s32.totalorder %v184, %v371
        %vm396 = vcmp.eq.s32.totalorder %v184, %v372
        %vm397 = vcmp.eq.s32.totalorder %v184, %v373
        %vm398 = vcmp.eq.s32.totalorder %v184, %v374
        %vm399 = vcmp.eq.s32.totalorder %v184, %v375
        %vm400 = vcmp.eq.s32.totalorder %v185, %v368
        %vm401 = vcmp.eq.s32.totalorder %v185, %v369
        %vm402 = vcmp.eq.s32.totalorder %v185, %v370
        %vm403 = vcmp.eq.s32.totalorder %v185, %v371
        %vm404 = vcmp.eq.s32.totalorder %v185, %v372
        %vm405 = vcmp.eq.s32.totalorder %v185, %v373
        %vm406 = vcmp.eq.s32.totalorder %v185, %v374
        %vm407 = vcmp.eq.s32.totalorder %v185, %v375
        %vm408 = vcmp.eq.s32.totalorder %v186, %v368
        %vm409 = vcmp.eq.s32.totalorder %v186, %v369
        %vm410 = vcmp.eq.s32.totalorder %v186, %v370
        %vm411 = vcmp.eq.s32.totalorder %v186, %v371
        %vm412 = vcmp.eq.s32.totalorder %v186, %v372
        %vm413 = vcmp.eq.s32.totalorder %v186, %v373
        %vm414 = vcmp.eq.s32.totalorder %v186, %v374
        %vm415 = vcmp.eq.s32.totalorder %v186, %v375
        %vm416 = vcmp.eq.s32.totalorder %v187, %v368
        %vm417 = vcmp.eq.s32.totalorder %v187, %v369
        %vm418 = vcmp.eq.s32.totalorder %v187, %v370
        %vm419 = vcmp.eq.s32.totalorder %v187, %v371
        %vm420 = vcmp.eq.s32.totalorder %v187, %v372
        %vm421 = vcmp.eq.s32.totalorder %v187, %v373
        %vm422 = vcmp.eq.s32.totalorder %v187, %v374
        %vm423 = vcmp.eq.s32.totalorder %v187, %v375
        %v424 = vsel %vm376, 1.0, %v273
        %v425 = vsel %vm377, 1.0, %v274
        %v426 = vsel %vm378, 1.0, %v275
        %v427 = vsel %vm379, 1.0, %v276
        %v428 = vsel %vm380, 1.0, %v277
        %v429 = vsel %vm381, 1.0, %v278
        %v430 = vsel %vm382, 1.0, %v279
        %v431 = vsel %vm383, 1.0, %v280
        %v432 = vsel %vm384, 1.0, %v281
        %v433 = vsel %vm385, 1.0, %v282
        %v434 = vsel %vm386, 1.0, %v283
        %v435 = vsel %vm387, 1.0, %v284
        %v436 = vsel %vm388, 1.0, %v285
        %v437 = vsel %vm389, 1.0, %v286
        %v438 = vsel %vm390, 1.0, %v287
        %v439 = vsel %vm391, 1.0, %v288
        %v440 = vsel %vm392, 1.0, %v289
        %v441 = vsel %vm393, 1.0, %v290
        %v442 = vsel %vm394, 1.0, %v291
        %v443 = vsel %vm395, 1.0, %v292
        %v444 = vsel %vm396, 1.0, %v293
        %v445 = vsel %vm397, 1.0, %v294
        %v446 = vsel %vm398, 1.0, %v295
        %v447 = vsel %vm399, 1.0, %v296
        %v448 = vsel %vm400, 1.0, %v297
        %v449 = vsel %vm401, 1.0, %v298
        %v450 = vsel %vm402, 1.0, %v299
        %v451 = vsel %vm403, 1.0, %v300
        %v452 = vsel %vm404, 1.0, %v301
        %v453 = vsel %vm405, 1.0, %v302
        %v454 = vsel %vm406, 1.0, %v303
        %v455 = vsel %vm407, 1.0, %v304
        %v456 = vsel %vm408, 1.0, %v305
        %v457 = vsel %vm409, 1.0, %v306
        %v458 = vsel %vm410, 1.0, %v307
        %v459 = vsel %vm411, 1.0, %v308
        %v460 = vsel %vm412, 1.0, %v309
        %v461 = vsel %vm413, 1.0, %v310
        %v462 = vsel %vm414, 1.0, %v311
        %v463 = vsel %vm415, 1.0, %v312
        %v464 = vsel %vm416, 1.0, %v313
        %v465 = vsel %vm417, 1.0, %v314
        %v466 = vsel %vm418, 1.0, %v315
        %v467 = vsel %vm419, 1.0, %v316
        %v468 = vsel %vm420, 1.0, %v317
        %v469 = vsel %vm421, 1.0, %v318
        %v470 = vsel %vm422, 1.0, %v319
        %v471 = vsel %vm423, 1.0, %v320
        %v473 = vperm.slane %v365, 0
        %v474 = vperm.slane %v365, 1
        %v475 = vperm.slane %v365, 2
        %v476 = vperm.slane %v365, 3
        %v477 = vperm.slane %v365, 4
        %v478 = vperm.slane %v365, 5
        %v479 = vperm.slane %v365, 6
        %v480 = vperm.slane %v365, 7
        %v489 = vrcp.pop 6.4
        %v490 = vmul.f32 6.4, %v489
        %v491 = vsub.f32 1.0, %v490
        %v492 = vmul.f32 %v489, %v491
        %v493 = vadd.f32 %v489, %v492
        %vm494 = vweird.f32 %v489
        %v495 = vsel %vm494, %v489, %v493
        %v496 = vmul.f32 %v180, %v495
        %v497 = vfloor.f32 %v496
        %v498 = vmul.f32 %v497, 6.4
        %v499 = vadd.f32 %v498, 6.4
        %v500 = vsub.f32 %v180, %v498
        %v501 = vsub.f32 %v499, %v498
        %v502 = vrcp.pop %v501
        %v503 = vmul.f32 %v501, %v502
        %v504 = vsub.f32 1.0, %v503
        %v505 = vmul.f32 %v502, %v504
        %v506 = vadd.f32 %v502, %v505
        %vm507 = vweird.f32 %v501
        %vm508 = vweird.f32 %v502
        %vm509 = vmor %vm507, %vm508
        %v510 = vsel %vm509, %v502, %v506
        %v511 = vand.u32 2147483647, %v501
        %vm512 = vcmp.eq.f32.partialorder %v511, 8.507059e+37
        %v513 = vand.u32 %v501, 2147483648
        %v514 = vor.u32 1.1754944e-38, %v513
        %v515 = vsel %vm512, %v514, %v510
        %v516 = vmul.f32 %v500, %v515
        %v517 = vcvt.f32.s32.to.zero.pseudo %v497
        %v518 = vadd.s32 %v517, 14
        %v519 = vperm.slane %v518, 0
        %v520 = vperm.slane %v518, 1
        %v521 = vperm.slane %v518, 2
        %v522 = vperm.slane %v518, 3
        %v523 = vperm.slane %v518, 4
        %v524 = vperm.slane %v518, 5
        %v525 = vperm.slane %v518, 6
        %v526 = vperm.slane %v518, 7
        %vm527 = vcmp.eq.s32.totalorder %v182, %v519
        %vm528 = vcmp.eq.s32.totalorder %v182, %v520
        %vm529 = vcmp.eq.s32.totalorder %v182, %v521
        %vm530 = vcmp.eq.s32.totalorder %v182, %v522
        %vm531 = vcmp.eq.s32.totalorder %v182, %v523
        %vm532 = vcmp.eq.s32.totalorder %v182, %v524
        %vm533 = vcmp.eq.s32.totalorder %v182, %v525
        %vm534 = vcmp.eq.s32.totalorder %v182, %v526
        %vm535 = vcmp.eq.s32.totalorder %v183, %v519
        %vm536 = vcmp.eq.s32.totalorder %v183, %v520
        %vm537 = vcmp.eq.s32.totalorder %v183, %v521
        %vm538 = vcmp.eq.s32.totalorder %v183, %v522
        %vm539 = vcmp.eq.s32.totalorder %v183, %v523
        %vm540 = vcmp.eq.s32.totalorder %v183, %v524
        %vm541 = vcmp.eq.s32.totalorder %v183, %v525
        %vm542 = vcmp.eq.s32.totalorder %v183, %v526
        %vm543 = vcmp.eq.s32.totalorder %v184, %v519
        %vm544 = vcmp.eq.s32.totalorder %v184, %v520
        %vm545 = vcmp.eq.s32.totalorder %v184, %v521
        %vm546 = vcmp.eq.s32.totalorder %v184, %v522
        %vm547 = vcmp.eq.s32.totalorder %v184, %v523
        %vm548 = vcmp.eq.s32.totalorder %v184, %v524
        %vm549 = vcmp.eq.s32.totalorder %v184, %v525
        %vm550 = vcmp.eq.s32.totalorder %v184, %v526
        %vm551 = vcmp.eq.s32.totalorder %v185, %v519
        %vm552 = vcmp.eq.s32.totalorder %v185, %v520
        %vm553 = vcmp.eq.s32.totalorder %v185, %v521
        %vm554 = vcmp.eq.s32.totalorder %v185, %v522
        %vm555 = vcmp.eq.s32.totalorder %v185, %v523
        %vm556 = vcmp.eq.s32.totalorder %v185, %v524
        %vm557 = vcmp.eq.s32.totalorder %v185, %v525
        %vm558 = vcmp.eq.s32.totalorder %v185, %v526
        %vm559 = vcmp.eq.s32.totalorder %v186, %v519
        %vm560 = vcmp.eq.s32.totalorder %v186, %v520
        %vm561 = vcmp.eq.s32.totalorder %v186, %v521
        %vm562 = vcmp.eq.s32.totalorder %v186, %v522
        %vm563 = vcmp.eq.s32.totalorder %v186, %v523
        %vm564 = vcmp.eq.s32.totalorder %v186, %v524
        %vm565 = vcmp.eq.s32.totalorder %v186, %v525
        %vm566 = vcmp.eq.s32.totalorder %v186, %v526
        %vm567 = vcmp.eq.s32.totalorder %v187, %v519
        %vm568 = vcmp.eq.s32.totalorder %v187, %v520
        %vm569 = vcmp.eq.s32.totalorder %v187, %v521
        %vm570 = vcmp.eq.s32.totalorder %v187, %v522
        %vm571 = vcmp.eq.s32.totalorder %v187, %v523
        %vm572 = vcmp.eq.s32.totalorder %v187, %v524
        %vm573 = vcmp.eq.s32.totalorder %v187, %v525
        %vm574 = vcmp.eq.s32.totalorder %v187, %v526
        %v575 = vsel %vm527, 1.0, %v424
        %v576 = vsel %vm528, 1.0, %v425
        %v577 = vsel %vm529, 1.0, %v426
        %v578 = vsel %vm530, 1.0, %v427
        %v579 = vsel %vm531, 1.0, %v428
        %v580 = vsel %vm532, 1.0, %v429
        %v581 = vsel %vm533, 1.0, %v430
        %v582 = vsel %vm534, 1.0, %v431
        %v583 = vsel %vm535, 1.0, %v432
        %v584 = vsel %vm536, 1.0, %v433
        %v585 = vsel %vm537, 1.0, %v434
        %v586 = vsel %vm538, 1.0, %v435
        %v587 = vsel %vm539, 1.0, %v436
        %v588 = vsel %vm540, 1.0, %v437
        %v589 = vsel %vm541, 1.0, %v438
        %v590 = vsel %vm542, 1.0, %v439
        %v591 = vsel %vm543, 1.0, %v440
        %v592 = vsel %vm544, 1.0, %v441
        %v593 = vsel %vm545, 1.0, %v442
        %v594 = vsel %vm546, 1.0, %v443
        %v595 = vsel %vm547, 1.0, %v444
        %v596 = vsel %vm548, 1.0, %v445
        %v597 = vsel %vm549, 1.0, %v446
        %v598 = vsel %vm550, 1.0, %v447
        %v599 = vsel %vm551, 1.0, %v448
        %v600 = vsel %vm552, 1.0, %v449
        %v601 = vsel %vm553, 1.0, %v450
        %v602 = vsel %vm554, 1.0, %v451
        %v603 = vsel %vm555, 1.0, %v452
        %v604 = vsel %vm556, 1.0, %v453
        %v605 = vsel %vm557, 1.0, %v454
        %v606 = vsel %vm558, 1.0, %v455
        %v607 = vsel %vm559, 1.0, %v456
        %v608 = vsel %vm560, 1.0, %v457
        %v609 = vsel %vm561, 1.0, %v458
        %v610 = vsel %vm562, 1.0, %v459
        %v611 = vsel %vm563, 1.0, %v460
        %v612 = vsel %vm564, 1.0, %v461
        %v613 = vsel %vm565, 1.0, %v462
        %v614 = vsel %vm566, 1.0, %v463
        %v615 = vsel %vm567, 1.0, %v464
        %v616 = vsel %vm568, 1.0, %v465
        %v617 = vsel %vm569, 1.0, %v466
        %v618 = vsel %vm570, 1.0, %v467
        %v619 = vsel %vm571, 1.0, %v468
        %v620 = vsel %vm572, 1.0, %v469
        %v621 = vsel %vm573, 1.0, %v470
        %v622 = vsel %vm574, 1.0, %v471
        %v624 = vperm.slane %v516, 0
        %v625 = vperm.slane %v516, 1
        %v626 = vperm.slane %v516, 2
        %v627 = vperm.slane %v516, 3
        %v628 = vperm.slane %v516, 4
        %v629 = vperm.slane %v516, 5
        %v630 = vperm.slane %v516, 6
        %v631 = vperm.slane %v516, 7
        %v640 = vrcp.pop 4.266667
        %v641 = vmul.f32 4.266667, %v640
        %v642 = vsub.f32 1.0, %v641
        %v643 = vmul.f32 %v640, %v642
        %v644 = vadd.f32 %v640, %v643
        %vm645 = vweird.f32 %v640
        %v646 = vsel %vm645, %v640, %v644
        %v647 = vmul.f32 %v180, %v646
        %v648 = vfloor.f32 %v647
        %v649 = vmul.f32 %v648, 4.266667
        %v650 = vadd.f32 %v649, 4.266667
        %v651 = vsub.f32 %v180, %v649
        %v652 = vsub.f32 %v650, %v649
        %v653 = vrcp.pop %v652
        %v654 = vmul.f32 %v652, %v653
        %v655 = vsub.f32 1.0, %v654
        %v656 = vmul.f32 %v653, %v655
        %v657 = vadd.f32 %v653, %v656
        %vm658 = vweird.f32 %v652
        %vm659 = vweird.f32 %v653
        %vm660 = vmor %vm658, %vm659
        %v661 = vsel %vm660, %v653, %v657
        %v662 = vand.u32 2147483647, %v652
        %vm663 = vcmp.eq.f32.partialorder %v662, 8.507059e+37
        %v664 = vand.u32 %v652, 2147483648
        %v665 = vor.u32 1.1754944e-38, %v664
        %v666 = vsel %vm663, %v665, %v661
        %v667 = vmul.f32 %v651, %v666
        %v668 = vcvt.f32.s32.to.zero.pseudo %v648
        %v669 = vadd.s32 %v668, 26
        %v670 = vperm.slane %v669, 0
        %v671 = vperm.slane %v669, 1
        %v672 = vperm.slane %v669, 2
        %v673 = vperm.slane %v669, 3
        %v674 = vperm.slane %v669, 4
        %v675 = vperm.slane %v669, 5
        %v676 = vperm.slane %v669, 6
        %v677 = vperm.slane %v669, 7
        %vm678 = vcmp.eq.s32.totalorder %v182, %v670
        %vm679 = vcmp.eq.s32.totalorder %v182, %v671
        %vm680 = vcmp.eq.s32.totalorder %v182, %v672
        %vm681 = vcmp.eq.s32.totalorder %v182, %v673
        %vm682 = vcmp.eq.s32.totalorder %v182, %v674
        %vm683 = vcmp.eq.s32.totalorder %v182, %v675
        %vm684 = vcmp.eq.s32.totalorder %v182, %v676
        %vm685 = vcmp.eq.s32.totalorder %v182, %v677
        %vm686 = vcmp.eq.s32.totalorder %v183, %v670
        %vm687 = vcmp.eq.s32.totalorder %v183, %v671
        %vm688 = vcmp.eq.s32.totalorder %v183, %v672
        %vm689 = vcmp.eq.s32.totalorder %v183, %v673
        %vm690 = vcmp.eq.s32.totalorder %v183, %v674
        %vm691 = vcmp.eq.s32.totalorder %v183, %v675
        %vm692 = vcmp.eq.s32.totalorder %v183, %v676
        %vm693 = vcmp.eq.s32.totalorder %v183, %v677
        %vm694 = vcmp.eq.s32.totalorder %v184, %v670
        %vm695 = vcmp.eq.s32.totalorder %v184, %v671
        %vm696 = vcmp.eq.s32.totalorder %v184, %v672
        %vm697 = vcmp.eq.s32.totalorder %v184, %v673
        %vm698 = vcmp.eq.s32.totalorder %v184, %v674
        %vm699 = vcmp.eq.s32.totalorder %v184, %v675
        %vm700 = vcmp.eq.s32.totalorder %v184, %v676
        %vm701 = vcmp.eq.s32.totalorder %v184, %v677
        %vm702 = vcmp.eq.s32.totalorder %v185, %v670
        %vm703 = vcmp.eq.s32.totalorder %v185, %v671
        %vm704 = vcmp.eq.s32.totalorder %v185, %v672
        %vm705 = vcmp.eq.s32.totalorder %v185, %v673
        %vm706 = vcmp.eq.s32.totalorder %v185, %v674
        %vm707 = vcmp.eq.s32.totalorder %v185, %v675
        %vm708 = vcmp.eq.s32.totalorder %v185, %v676
        %vm709 = vcmp.eq.s32.totalorder %v185, %v677
        %vm710 = vcmp.eq.s32.totalorder %v186, %v670
        %vm711 = vcmp.eq.s32.totalorder %v186, %v671
        %vm712 = vcmp.eq.s32.totalorder %v186, %v672
        %vm713 = vcmp.eq.s32.totalorder %v186, %v673
        %vm714 = vcmp.eq.s32.totalorder %v186, %v674
        %vm715 = vcmp.eq.s32.totalorder %v186, %v675
        %vm716 = vcmp.eq.s32.totalorder %v186, %v676
        %vm717 = vcmp.eq.s32.totalorder %v186, %v677
        %vm718 = vcmp.eq.s32.totalorder %v187, %v670
        %vm719 = vcmp.eq.s32.totalorder %v187, %v671
        %vm720 = vcmp.eq.s32.totalorder %v187, %v672
        %vm721 = vcmp.eq.s32.totalorder %v187, %v673
        %vm722 = vcmp.eq.s32.totalorder %v187, %v674
        %vm723 = vcmp.eq.s32.totalorder %v187, %v675
        %vm724 = vcmp.eq.s32.totalorder %v187, %v676
        %vm725 = vcmp.eq.s32.totalorder %v187, %v677
        %v726 = vsel %vm678, 1.0, %v575
        %v727 = vsel %vm679, 1.0, %v576
        %v728 = vsel %vm680, 1.0, %v577
        %v729 = vsel %vm681, 1.0, %v578
        %v730 = vsel %vm682, 1.0, %v579
        %v731 = vsel %vm683, 1.0, %v580
        %v732 = vsel %vm684, 1.0, %v581
        %v733 = vsel %vm685, 1.0, %v582
        %v734 = vsel %vm686, 1.0, %v583
        %v735 = vsel %vm687, 1.0, %v584
        %v736 = vsel %vm688, 1.0, %v585
        %v737 = vsel %vm689, 1.0, %v586
        %v738 = vsel %vm690, 1.0, %v587
        %v739 = vsel %vm691, 1.0, %v588
        %v740 = vsel %vm692, 1.0, %v589
        %v741 = vsel %vm693, 1.0, %v590
        %v742 = vsel %vm694, 1.0, %v591
        %v743 = vsel %vm695, 1.0, %v592
        %v744 = vsel %vm696, 1.0, %v593
        %v745 = vsel %vm697, 1.0, %v594
        %v746 = vsel %vm698, 1.0, %v595
        %v747 = vsel %vm699, 1.0, %v596
        %v748 = vsel %vm700, 1.0, %v597
        %v749 = vsel %vm701, 1.0, %v598
        %v750 = vsel %vm702, 1.0, %v599
        %v751 = vsel %vm703, 1.0, %v600
        %v752 = vsel %vm704, 1.0, %v601
        %v753 = vsel %vm705, 1.0, %v602
        %v754 = vsel %vm706, 1.0, %v603
        %v755 = vsel %vm707, 1.0, %v604
        %v756 = vsel %vm708, 1.0, %v605
        %v757 = vsel %vm709, 1.0, %v606
        %v758 = vsel %vm710, 1.0, %v607
        %v759 = vsel %vm711, 1.0, %v608
        %v760 = vsel %vm712, 1.0, %v609
        %v761 = vsel %vm713, 1.0, %v610
        %v762 = vsel %vm714, 1.0, %v611
        %v763 = vsel %vm715, 1.0, %v612
        %v764 = vsel %vm716, 1.0, %v613
        %v765 = vsel %vm717, 1.0, %v614
        %v766 = vsel %vm718, 1.0, %v615
        %v767 = vsel %vm719, 1.0, %v616
        %v768 = vsel %vm720, 1.0, %v617
        %v769 = vsel %vm721, 1.0, %v618
        %v770 = vsel %vm722, 1.0, %v619
        %v771 = vsel %vm723, 1.0, %v620
        %v772 = vsel %vm724, 1.0, %v621
        %v773 = vsel %vm725, 1.0, %v622
        %v775 = vperm.slane %v667, 0
        %v776 = vperm.slane %v667, 1
        %v777 = vperm.slane %v667, 2
        %v778 = vperm.slane %v667, 3
        %v779 = vperm.slane %v667, 4
        %v780 = vperm.slane %v667, 5
        %v781 = vperm.slane %v667, 6
        %v782 = vperm.slane %v667, 7
        %vm791 = vcmask 1041408
        %v792 = vsel %vm791, %v322, %v473
        %v793 = vsel %vm791, %v323, %v474
        %v794 = vsel %vm791, %v324, %v475
        %v795 = vsel %vm791, %v325, %v476
        %v796 = vsel %vm791, %v326, %v477
        %v797 = vsel %vm791, %v327, %v478
        %v798 = vsel %vm791, %v328, %v479
        %v799 = vsel %vm791, %v329, %v480
        %vm800 = vcmask 1043456
        %v801 = vsel %vm800, %v792, %v624
        %v802 = vsel %vm800, %v793, %v625
        %v803 = vsel %vm800, %v794, %v626
        %v804 = vsel %vm800, %v795, %v627
        %v805 = vsel %vm800, %v796, %v628
        %v806 = vsel %vm800, %v797, %v629
        %v807 = vsel %vm800, %v798, %v630
        %v808 = vsel %vm800, %v799, %v631
        %vm809 = vcmask 1045504
        %v810 = vsel %vm809, %v801, %v775
        %v811 = vsel %vm809, %v802, %v776
        %v812 = vsel %vm809, %v803, %v777
        %v813 = vsel %vm809, %v804, %v778
        %v814 = vsel %vm809, %v805, %v779
        %v815 = vsel %vm809, %v806, %v780
        %v816 = vsel %vm809, %v807, %v781
        %v817 = vsel %vm809, %v808, %v782
        %v818 = vld [vmem:[#allocation5] sm:$0xff]
        %v819 = vld [vmem:[#allocation5 + $0x8] sm:$0xff]
        %vm820 = vcmask 392192
        %v822 = vsel %vm820, %v818, 0
        %v825 = vsel %vm820, %v819, 0
        %827 = vmatpush.msra.mxu0 0.0
        %828 = vmatpush.msra.mxu0 0.0
        %829 = vmatpush.msra.mxu0 0.0
        %830 = vmatpush.msra.mxu0 0.0
        %831 = vmatpush.msra.mxu0 0.0
        %832 = vmatpush.msra.mxu0 0.0
        %833 = vmatpush.msra.mxu0 0.0
        %834 = vmatpush.msra.mxu0 0.0
        %835 = vmatpush.msra.mxu0 0.0
        %836 = vmatpush.msra.mxu0 0.0
        %v837 = vand.u32 %v766, 4294901760
        %838 = vmatpush.msra.mxu0 %v837
        %v839 = vand.u32 %v758, 4294901760
        %840 = vmatpush.msra.mxu0 %v839
        %v841 = vand.u32 %v750, 4294901760
        %842 = vmatpush.msra.mxu0 %v841
        %v843 = vand.u32 %v742, 4294901760
        %844 = vmatpush.msra.mxu0 %v843
        %v845 = vand.u32 %v734, 4294901760
        %846 = vmatpush.msra.mxu0 %v845
        %v847 = vand.u32 %v726, 4294901760
        %848 = vmatpush.msra.mxu0 %v847
        %v849 = vand.u32 %v822, 4294901760
        %v850 = vsub.f32 %v822, %v849
        %v851 = vand.u32 %v850, 4294901760
        %v852 = vsub.f32 %v850, %v851
        %v853 = vand.u32 %v852, 4294901760
        %854 = vmatmul.f32.gmra.mxu0 %v853
        %v855 = vpop.f32.mrf.mxu0
        %v856 = vadd.f32 0.0, %v855
        %v857 = vand.u32 %v825, 4294901760
        %v858 = vsub.f32 %v825, %v857
        %v859 = vand.u32 %v858, 4294901760
        %v860 = vsub.f32 %v858, %v859
        %v861 = vand.u32 %v860, 4294901760
        %862 = vmatmul.f32.gmra.mxu0 %v861
        %v863 = vpop.f32.mrf.mxu0
        %v864 = vadd.f32 0.0, %v863
        %865 = vdwg.mxu0
        %866 = vmatpush.msra.mxu0 0.0
        %867 = vmatpush.msra.mxu0 0.0
        %868 = vmatpush.msra.mxu0 0.0
        %869 = vmatpush.msra.mxu0 0.0
        %870 = vmatpush.msra.mxu0 0.0
        %871 = vmatpush.msra.mxu0 0.0
        %872 = vmatpush.msra.mxu0 0.0
        %873 = vmatpush.msra.mxu0 0.0
        %874 = vmatpush.msra.mxu0 0.0
        %875 = vmatpush.msra.mxu0 0.0
        %v876 = vand.u32 %v766, 4294901760
        %v877 = vsub.f32 %v766, %v876
        %v878 = vand.u32 %v877, 4294901760
        %v879 = vsub.f32 %v877, %v878
        %v880 = vand.u32 %v879, 4294901760
        %881 = vmatpush.msra.mxu0 %v880
        %v882 = vand.u32 %v758, 4294901760
        %v883 = vsub.f32 %v758, %v882
        %v884 = vand.u32 %v883, 4294901760
        %v885 = vsub.f32 %v883, %v884
        %v886 = vand.u32 %v885, 4294901760
        %887 = vmatpush.msra.mxu0 %v886
        %v888 = vand.u32 %v750, 4294901760
        %v889 = vsub.f32 %v750, %v888
        %v890 = vand.u32 %v889, 4294901760
        %v891 = vsub.f32 %v889, %v890
        %v892 = vand.u32 %v891, 4294901760
        %893 = vmatpush.msra.mxu0 %v892
        %v894 = vand.u32 %v742, 4294901760
        %v895 = vsub.f32 %v742, %v894
        %v896 = vand.u32 %v895, 4294901760
        %v897 = vsub.f32 %v895, %v896
        %v898 = vand.u32 %v897, 4294901760
        %899 = vmatpush.msra.mxu0 %v898
        %v900 = vand.u32 %v734, 4294901760
        %v901 = vsub.f32 %v734, %v900
        %v902 = vand.u32 %v901, 4294901760
        %v903 = vsub.f32 %v901, %v902
        %v904 = vand.u32 %v903, 4294901760
        %905 = vmatpush.msra.mxu0 %v904
        %v906 = vand.u32 %v726, 4294901760
        %v907 = vsub.f32 %v726, %v906
        %v908 = vand.u32 %v907, 4294901760
        %v909 = vsub.f32 %v907, %v908
        %v910 = vand.u32 %v909, 4294901760
        %911 = vmatpush.msra.mxu0 %v910
        %v912 = vand.u32 %v822, 4294901760
        %913 = vmatmul.f32.gmra.mxu0 %v912
        %v914 = vpop.f32.mrf.mxu0
        %v915 = vadd.f32 %v856, %v914
        %v916 = vand.u32 %v825, 4294901760
        %917 = vmatmul.f32.gmra.mxu0 %v916
        %v918 = vpop.f32.mrf.mxu0
        %v919 = vadd.f32 %v864, %v918
        %920 = vdwg.mxu0
        %921 = vmatpush.msra.mxu0 0.0
        %922 = vmatpush.msra.mxu0 0.0
        %923 = vmatpush.msra.mxu0 0.0
        %924 = vmatpush.msra.mxu0 0.0
        %925 = vmatpush.msra.mxu0 0.0
        %926 = vmatpush.msra.mxu0 0.0
        %927 = vmatpush.msra.mxu0 0.0
        %928 = vmatpush.msra.mxu0 0.0
        %929 = vmatpush.msra.mxu0 0.0
        %930 = vmatpush.msra.mxu0 0.0
        %v931 = vand.u32 %v766, 4294901760
        %v932 = vsub.f32 %v766, %v931
        %933 = vmatpush.msra.mxu0 %v932
        %v934 = vand.u32 %v758, 4294901760
        %v935 = vsub.f32 %v758, %v934
        %936 = vmatpush.msra.mxu0 %v935
        %v937 = vand.u32 %v750, 4294901760
        %v938 = vsub.f32 %v750, %v937
        %939 = vmatpush.msra.mxu0 %v938
        %v940 = vand.u32 %v742, 4294901760
        %v941 = vsub.f32 %v742, %v940
        %942 = vmatpush.msra.mxu0 %v941
        %v943 = vand.u32 %v734, 4294901760
        %v944 = vsub.f32 %v734, %v943
        %945 = vmatpush.msra.mxu0 %v944
        %v946 = vand.u32 %v726, 4294901760
        %v947 = vsub.f32 %v726, %v946
        %948 = vmatpush.msra.mxu0 %v947
        %v949 = vand.u32 %v822, 4294901760
        %v950 = vsub.f32 %v822, %v949
        %951 = vmatmul.f32.gmra.mxu0 %v950
        %v952 = vpop.f32.mrf.mxu0
        %v953 = vadd.f32 %v915, %v952
        %v954 = vand.u32 %v825, 4294901760
        %v955 = vsub.f32 %v825, %v954
        %956 = vmatmul.f32.gmra.mxu0 %v955
        %v957 = vpop.f32.mrf.mxu0
        %v958 = vadd.f32 %v919, %v957
        %959 = vdwg.mxu0
        %960 = vmatpush.msra.mxu0 0.0
        %961 = vmatpush.msra.mxu0 0.0
        %962 = vmatpush.msra.mxu0 0.0
        %963 = vmatpush.msra.mxu0 0.0
        %964 = vmatpush.msra.mxu0 0.0
        %965 = vmatpush.msra.mxu0 0.0
        %966 = vmatpush.msra.mxu0 0.0
        %967 = vmatpush.msra.mxu0 0.0
        %968 = vmatpush.msra.mxu0 0.0
        %969 = vmatpush.msra.mxu0 0.0
        %v970 = vand.u32 %v766, 4294901760
        %971 = vmatpush.msra.mxu0 %v970
        %v972 = vand.u32 %v758, 4294901760
        %973 = vmatpush.msra.mxu0 %v972
        %v974 = vand.u32 %v750, 4294901760
        %975 = vmatpush.msra.mxu0 %v974
        %v976 = vand.u32 %v742, 4294901760
        %977 = vmatpush.msra.mxu0 %v976
        %v978 = vand.u32 %v734, 4294901760
        %979 = vmatpush.msra.mxu0 %v978
        %v980 = vand.u32 %v726, 4294901760
        %981 = vmatpush.msra.mxu0 %v980
        %v982 = vand.u32 %v822, 4294901760
        %v983 = vsub.f32 %v822, %v982
        %v984 = vand.u32 %v983, 4294901760
        %985 = vmatmul.f32.gmra.mxu0 %v984
        %v986 = vpop.f32.mrf.mxu0
        %v987 = vadd.f32 %v953, %v986
        %v988 = vand.u32 %v825, 4294901760
        %v989 = vsub.f32 %v825, %v988
        %v990 = vand.u32 %v989, 4294901760
        %991 = vmatmul.f32.gmra.mxu0 %v990
        %v992 = vpop.f32.mrf.mxu0
        %v993 = vadd.f32 %v958, %v992
        %994 = vdwg.mxu0
        %995 = vmatpush.msra.mxu0 0.0
        %996 = vmatpush.msra.mxu0 0.0
        %997 = vmatpush.msra.mxu0 0.0
        %998 = vmatpush.msra.mxu0 0.0
        %999 = vmatpush.msra.mxu0 0.0
        %1000 = vmatpush.msra.mxu0 0.0
        %1001 = vmatpush.msra.mxu0 0.0
        %1002 = vmatpush.msra.mxu0 0.0
        %1003 = vmatpush.msra.mxu0 0.0
        %1004 = vmatpush.msra.mxu0 0.0
        %v1005 = vand.u32 %v766, 4294901760
        %v1006 = vsub.f32 %v766, %v1005
        %v1007 = vand.u32 %v1006, 4294901760
        %1008 = vmatpush.msra.mxu0 %v1007
        %v1009 = vand.u32 %v758, 4294901760
        %v1010 = vsub.f32 %v758, %v1009
        %v1011 = vand.u32 %v1010, 4294901760
        %1012 = vmatpush.msra.mxu0 %v1011
        %v1013 = vand.u32 %v750, 4294901760
        %v1014 = vsub.f32 %v750, %v1013
        %v1015 = vand.u32 %v1014, 4294901760
        %1016 = vmatpush.msra.mxu0 %v1015
        %v1017 = vand.u32 %v742, 4294901760
        %v1018 = vsub.f32 %v742, %v1017
        %v1019 = vand.u32 %v1018, 4294901760
        %1020 = vmatpush.msra.mxu0 %v1019
        %v1021 = vand.u32 %v734, 4294901760
        %v1022 = vsub.f32 %v734, %v1021
        %v1023 = vand.u32 %v1022, 4294901760
        %1024 = vmatpush.msra.mxu0 %v1023
        %v1025 = vand.u32 %v726, 4294901760
        %v1026 = vsub.f32 %v726, %v1025
        %v1027 = vand.u32 %v1026, 4294901760
        %1028 = vmatpush.msra.mxu0 %v1027
        %v1029 = vand.u32 %v822, 4294901760
        %1030 = vmatmul.f32.gmra.mxu0 %v1029
        %v1031 = vpop.f32.mrf.mxu0
        %v1032 = vadd.f32 %v987, %v1031
        %v1033 = vand.u32 %v825, 4294901760
        %1034 = vmatmul.f32.gmra.mxu0 %v1033
        %v1035 = vpop.f32.mrf.mxu0
        %v1036 = vadd.f32 %v993, %v1035
        %1037 = vdwg.mxu0
        %1038 = vmatpush.msra.mxu0 0.0
        %1039 = vmatpush.msra.mxu0 0.0
        %1040 = vmatpush.msra.mxu0 0.0
        %1041 = vmatpush.msra.mxu0 0.0
        %1042 = vmatpush.msra.mxu0 0.0
        %1043 = vmatpush.msra.mxu0 0.0
        %1044 = vmatpush.msra.mxu0 0.0
        %1045 = vmatpush.msra.mxu0 0.0
        %1046 = vmatpush.msra.mxu0 0.0
        %1047 = vmatpush.msra.mxu0 0.0
        %v1048 = vand.u32 %v766, 4294901760
        %1049 = vmatpush.msra.mxu0 %v1048
        %v1050 = vand.u32 %v758, 4294901760
        %1051 = vmatpush.msra.mxu0 %v1050
        %v1052 = vand.u32 %v750, 4294901760
        %1053 = vmatpush.msra.mxu0 %v1052
        %v1054 = vand.u32 %v742, 4294901760
        %1055 = vmatpush.msra.mxu0 %v1054
        %v1056 = vand.u32 %v734, 4294901760
        %1057 = vmatpush.msra.mxu0 %v1056
        %v1058 = vand.u32 %v726, 4294901760
        %1059 = vmatpush.msra.mxu0 %v1058
        %v1060 = vand.u32 %v822, 4294901760
        %1061 = vmatmul.f32.gmra.mxu0 %v1060
        %v1062 = vpop.f32.mrf.mxu0
        %v1063 = vadd.f32 %v1032, %v1062
        %v1064 = vand.u32 %v825, 4294901760
        %1065 = vmatmul.f32.gmra.mxu0 %v1064
        %v1066 = vpop.f32.mrf.mxu0
        %v1067 = vadd.f32 %v1036, %v1066
        %1068 = vdwg.mxu0
        %1069 = vmatpush.msra.mxu0 0.0
        %1070 = vmatpush.msra.mxu0 0.0
        %1071 = vmatpush.msra.mxu0 0.0
        %1072 = vmatpush.msra.mxu0 0.0
        %1073 = vmatpush.msra.mxu0 0.0
        %1074 = vmatpush.msra.mxu0 0.0
        %1075 = vmatpush.msra.mxu0 0.0
        %1076 = vmatpush.msra.mxu0 0.0
        %1077 = vmatpush.msra.mxu0 0.0
        %1078 = vmatpush.msra.mxu0 0.0
        %v1079 = vand.u32 %v767, 4294901760
        %1080 = vmatpush.msra.mxu0 %v1079
        %v1081 = vand.u32 %v759, 4294901760
        %1082 = vmatpush.msra.mxu0 %v1081
        %v1083 = vand.u32 %v751, 4294901760
        %1084 = vmatpush.msra.mxu0 %v1083
        %v1085 = vand.u32 %v743, 4294901760
        %1086 = vmatpush.msra.mxu0 %v1085
        %v1087 = vand.u32 %v735, 4294901760
        %1088 = vmatpush.msra.mxu0 %v1087
        %v1089 = vand.u32 %v727, 4294901760
        %1090 = vmatpush.msra.mxu0 %v1089
        %v1091 = vand.u32 %v822, 4294901760
        %v1092 = vsub.f32 %v822, %v1091
        %v1093 = vand.u32 %v1092, 4294901760
        %v1094 = vsub.f32 %v1092, %v1093
        %v1095 = vand.u32 %v1094, 4294901760
        %1096 = vmatmul.f32.gmra.mxu0 %v1095
        %v1097 = vpop.f32.mrf.mxu0
        %v1098 = vadd.f32 0.0, %v1097
        %v1099 = vand.u32 %v825, 4294901760
        %v1100 = vsub.f32 %v825, %v1099
        %v1101 = vand.u32 %v1100, 4294901760
        %v1102 = vsub.f32 %v1100, %v1101
        %v1103 = vand.u32 %v1102, 4294901760
        %1104 = vmatmul.f32.gmra.mxu0 %v1103
        %v1105 = vpop.f32.mrf.mxu0
        %v1106 = vadd.f32 0.0, %v1105
        %1107 = vdwg.mxu0
        %1108 = vmatpush.msra.mxu0 0.0
        %1109 = vmatpush.msra.mxu0 0.0
        %1110 = vmatpush.msra.mxu0 0.0
        %1111 = vmatpush.msra.mxu0 0.0
        %1112 = vmatpush.msra.mxu0 0.0
        %1113 = vmatpush.msra.mxu0 0.0
        %1114 = vmatpush.msra.mxu0 0.0
        %1115 = vmatpush.msra.mxu0 0.0
        %1116 = vmatpush.msra.mxu0 0.0
        %1117 = vmatpush.msra.mxu0 0.0
        %v1118 = vand.u32 %v767, 4294901760
        %v1119 = vsub.f32 %v767, %v1118
        %v1120 = vand.u32 %v1119, 4294901760
        %v1121 = vsub.f32 %v1119, %v1120
        %v1122 = vand.u32 %v1121, 4294901760
        %1123 = vmatpush.msra.mxu0 %v1122
        %v1124 = vand.u32 %v759, 4294901760
        %v1125 = vsub.f32 %v759, %v1124
        %v1126 = vand.u32 %v1125, 4294901760
        %v1127 = vsub.f32 %v1125, %v1126
        %v1128 = vand.u32 %v1127, 4294901760
        %1129 = vmatpush.msra.mxu0 %v1128
        %v1130 = vand.u32 %v751, 4294901760
        %v1131 = vsub.f32 %v751, %v1130
        %v1132 = vand.u32 %v1131, 4294901760
        %v1133 = vsub.f32 %v1131, %v1132
        %v1134 = vand.u32 %v1133, 4294901760
        %1135 = vmatpush.msra.mxu0 %v1134
        %v1136 = vand.u32 %v743, 4294901760
        %v1137 = vsub.f32 %v743, %v1136
        %v1138 = vand.u32 %v1137, 4294901760
        %v1139 = vsub.f32 %v1137, %v1138
        %v1140 = vand.u32 %v1139, 4294901760
        %1141 = vmatpush.msra.mxu0 %v1140
        %v1142 = vand.u32 %v735, 4294901760
        %v1143 = vsub.f32 %v735, %v1142
        %v1144 = vand.u32 %v1143, 4294901760
        %v1145 = vsub.f32 %v1143, %v1144
        %v1146 = vand.u32 %v1145, 4294901760
        %1147 = vmatpush.msra.mxu0 %v1146
        %v1148 = vand.u32 %v727, 4294901760
        %v1149 = vsub.f32 %v727, %v1148
        %v1150 = vand.u32 %v1149, 4294901760
        %v1151 = vsub.f32 %v1149, %v1150
        %v1152 = vand.u32 %v1151, 4294901760
        %1153 = vmatpush.msra.mxu0 %v1152
        %v1154 = vand.u32 %v822, 4294901760
        %1155 = vmatmul.f32.gmra.mxu0 %v1154
        %v1156 = vpop.f32.mrf.mxu0
        %v1157 = vadd.f32 %v1098, %v1156
        %v1158 = vand.u32 %v825, 4294901760
        %1159 = vmatmul.f32.gmra.mxu0 %v1158
        %v1160 = vpop.f32.mrf.mxu0
        %v1161 = vadd.f32 %v1106, %v1160
        %1162 = vdwg.mxu0
        %1163 = vmatpush.msra.mxu0 0.0
        %1164 = vmatpush.msra.mxu0 0.0
        %1165 = vmatpush.msra.mxu0 0.0
        %1166 = vmatpush.msra.mxu0 0.0
        %1167 = vmatpush.msra.mxu0 0.0
        %1168 = vmatpush.msra.mxu0 0.0
        %1169 = vmatpush.msra.mxu0 0.0
        %1170 = vmatpush.msra.mxu0 0.0
        %1171 = vmatpush.msra.mxu0 0.0
        %1172 = vmatpush.msra.mxu0 0.0
        %v1173 = vand.u32 %v767, 4294901760
        %v1174 = vsub.f32 %v767, %v1173
        %1175 = vmatpush.msra.mxu0 %v1174
        %v1176 = vand.u32 %v759, 4294901760
        %v1177 = vsub.f32 %v759, %v1176
        %1178 = vmatpush.msra.mxu0 %v1177
        %v1179 = vand.u32 %v751, 4294901760
        %v1180 = vsub.f32 %v751, %v1179
        %1181 = vmatpush.msra.mxu0 %v1180
        %v1182 = vand.u32 %v743, 4294901760
        %v1183 = vsub.f32 %v743, %v1182
        %1184 = vmatpush.msra.mxu0 %v1183
        %v1185 = vand.u32 %v735, 4294901760
        %v1186 = vsub.f32 %v735, %v1185
        %1187 = vmatpush.msra.mxu0 %v1186
        %v1188 = vand.u32 %v727, 4294901760
        %v1189 = vsub.f32 %v727, %v1188
        %1190 = vmatpush.msra.mxu0 %v1189
        %v1191 = vand.u32 %v822, 4294901760
        %v1192 = vsub.f32 %v822, %v1191
        %1193 = vmatmul.f32.gmra.mxu0 %v1192
        %v1194 = vpop.f32.mrf.mxu0
        %v1195 = vadd.f32 %v1157, %v1194
        %v1196 = vand.u32 %v825, 4294901760
        %v1197 = vsub.f32 %v825, %v1196
        %1198 = vmatmul.f32.gmra.mxu0 %v1197
        %v1199 = vpop.f32.mrf.mxu0
        %v1200 = vadd.f32 %v1161, %v1199
        %1201 = vdwg.mxu0
        %1202 = vmatpush.msra.mxu0 0.0
        %1203 = vmatpush.msra.mxu0 0.0
        %1204 = vmatpush.msra.mxu0 0.0
        %1205 = vmatpush.msra.mxu0 0.0
        %1206 = vmatpush.msra.mxu0 0.0
        %1207 = vmatpush.msra.mxu0 0.0
        %1208 = vmatpush.msra.mxu0 0.0
        %1209 = vmatpush.msra.mxu0 0.0
        %1210 = vmatpush.msra.mxu0 0.0
        %1211 = vmatpush.msra.mxu0 0.0
        %v1212 = vand.u32 %v767, 4294901760
        %1213 = vmatpush.msra.mxu0 %v1212
        %v1214 = vand.u32 %v759, 4294901760
        %1215 = vmatpush.msra.mxu0 %v1214
        %v1216 = vand.u32 %v751, 4294901760
        %1217 = vmatpush.msra.mxu0 %v1216
        %v1218 = vand.u32 %v743, 4294901760
        %1219 = vmatpush.msra.mxu0 %v1218
        %v1220 = vand.u32 %v735, 4294901760
        %1221 = vmatpush.msra.mxu0 %v1220
        %v1222 = vand.u32 %v727, 4294901760
        %1223 = vmatpush.msra.mxu0 %v1222
        %v1224 = vand.u32 %v822, 4294901760
        %v1225 = vsub.f32 %v822, %v1224
        %v1226 = vand.u32 %v1225, 4294901760
        %1227 = vmatmul.f32.gmra.mxu0 %v1226
        %v1228 = vpop.f32.mrf.mxu0
        %v1229 = vadd.f32 %v1195, %v1228
        %v1230 = vand.u32 %v825, 4294901760
        %v1231 = vsub.f32 %v825, %v1230
        %v1232 = vand.u32 %v1231, 4294901760
        %1233 = vmatmul.f32.gmra.mxu0 %v1232
        %v1234 = vpop.f32.mrf.mxu0
        %v1235 = vadd.f32 %v1200, %v1234
        %1236 = vdwg.mxu0
        %1237 = vmatpush.msra.mxu0 0.0
        %1238 = vmatpush.msra.mxu0 0.0
        %1239 = vmatpush.msra.mxu0 0.0
        %1240 = vmatpush.msra.mxu0 0.0
        %1241 = vmatpush.msra.mxu0 0.0
        %1242 = vmatpush.msra.mxu0 0.0
        %1243 = vmatpush.msra.mxu0 0.0
        %1244 = vmatpush.msra.mxu0 0.0
        %1245 = vmatpush.msra.mxu0 0.0
        %1246 = vmatpush.msra.mxu0 0.0
        %v1247 = vand.u32 %v767, 4294901760
        %v1248 = vsub.f32 %v767, %v1247
        %v1249 = vand.u32 %v1248, 4294901760
        %1250 = vmatpush.msra.mxu0 %v1249
        %v1251 = vand.u32 %v759, 4294901760
        %v1252 = vsub.f32 %v759, %v1251
        %v1253 = vand.u32 %v1252, 4294901760
        %1254 = vmatpush.msra.mxu0 %v1253
        %v1255 = vand.u32 %v751, 4294901760
        %v1256 = vsub.f32 %v751, %v1255
        %v1257 = vand.u32 %v1256, 4294901760
        %1258 = vmatpush.msra.mxu0 %v1257
        %v1259 = vand.u32 %v743, 4294901760
        %v1260 = vsub.f32 %v743, %v1259
        %v1261 = vand.u32 %v1260, 4294901760
        %1262 = vmatpush.msra.mxu0 %v1261
        %v1263 = vand.u32 %v735, 4294901760
        %v1264 = vsub.f32 %v735, %v1263
        %v1265 = vand.u32 %v1264, 4294901760
        %1266 = vmatpush.msra.mxu0 %v1265
        %v1267 = vand.u32 %v727, 4294901760
        %v1268 = vsub.f32 %v727, %v1267
        %v1269 = vand.u32 %v1268, 4294901760
        %1270 = vmatpush.msra.mxu0 %v1269
        %v1271 = vand.u32 %v822, 4294901760
        %1272 = vmatmul.f32.gmra.mxu0 %v1271
        %v1273 = vpop.f32.mrf.mxu0
        %v1274 = vadd.f32 %v1229, %v1273
        %v1275 = vand.u32 %v825, 4294901760
        %1276 = vmatmul.f32.gmra.mxu0 %v1275
        %v1277 = vpop.f32.mrf.mxu0
        %v1278 = vadd.f32 %v1235, %v1277
        %1279 = vdwg.mxu0
        %1280 = vmatpush.msra.mxu0 0.0
        %1281 = vmatpush.msra.mxu0 0.0
        %1282 = vmatpush.msra.mxu0 0.0
        %1283 = vmatpush.msra.mxu0 0.0
        %1284 = vmatpush.msra.mxu0 0.0
        %1285 = vmatpush.msra.mxu0 0.0
        %1286 = vmatpush.msra.mxu0 0.0
        %1287 = vmatpush.msra.mxu0 0.0
        %1288 = vmatpush.msra.mxu0 0.0
        %1289 = vmatpush.msra.mxu0 0.0
        %v1290 = vand.u32 %v767, 4294901760
        %1291 = vmatpush.msra.mxu0 %v1290
        %v1292 = vand.u32 %v759, 4294901760
        %1293 = vmatpush.msra.mxu0 %v1292
        %v1294 = vand.u32 %v751, 4294901760
        %1295 = vmatpush.msra.mxu0 %v1294
        %v1296 = vand.u32 %v743, 4294901760
        %1297 = vmatpush.msra.mxu0 %v1296
        %v1298 = vand.u32 %v735, 4294901760
        %1299 = vmatpush.msra.mxu0 %v1298
        %v1300 = vand.u32 %v727, 4294901760
        %1301 = vmatpush.msra.mxu0 %v1300
        %v1302 = vand.u32 %v822, 4294901760
        %1303 = vmatmul.f32.gmra.mxu0 %v1302
        %v1304 = vpop.f32.mrf.mxu0
        %v1305 = vadd.f32 %v1274, %v1304
        %v1306 = vand.u32 %v825, 4294901760
        %1307 = vmatmul.f32.gmra.mxu0 %v1306
        %v1308 = vpop.f32.mrf.mxu0
        %v1309 = vadd.f32 %v1278, %v1308
        %1310 = vdwg.mxu0
        %1311 = vmatpush.msra.mxu0 0.0
        %1312 = vmatpush.msra.mxu0 0.0
        %1313 = vmatpush.msra.mxu0 0.0
        %1314 = vmatpush.msra.mxu0 0.0
        %1315 = vmatpush.msra.mxu0 0.0
        %1316 = vmatpush.msra.mxu0 0.0
        %1317 = vmatpush.msra.mxu0 0.0
        %1318 = vmatpush.msra.mxu0 0.0
        %1319 = vmatpush.msra.mxu0 0.0
        %1320 = vmatpush.msra.mxu0 0.0
        %v1321 = vand.u32 %v768, 4294901760
        %1322 = vmatpush.msra.mxu0 %v1321
        %v1323 = vand.u32 %v760, 4294901760
        %1324 = vmatpush.msra.mxu0 %v1323
        %v1325 = vand.u32 %v752, 4294901760
        %1326 = vmatpush.msra.mxu0 %v1325
        %v1327 = vand.u32 %v744, 4294901760
        %1328 = vmatpush.msra.mxu0 %v1327
        %v1329 = vand.u32 %v736, 4294901760
        %1330 = vmatpush.msra.mxu0 %v1329
        %v1331 = vand.u32 %v728, 4294901760
        %1332 = vmatpush.msra.mxu0 %v1331
        %v1333 = vand.u32 %v822, 4294901760
        %v1334 = vsub.f32 %v822, %v1333
        %v1335 = vand.u32 %v1334, 4294901760
        %v1336 = vsub.f32 %v1334, %v1335
        %v1337 = vand.u32 %v1336, 4294901760
        %1338 = vmatmul.f32.gmra.mxu0 %v1337
        %v1339 = vpop.f32.mrf.mxu0
        %v1340 = vadd.f32 0.0, %v1339
        %v1341 = vand.u32 %v825, 4294901760
        %v1342 = vsub.f32 %v825, %v1341
        %v1343 = vand.u32 %v1342, 4294901760
        %v1344 = vsub.f32 %v1342, %v1343
        %v1345 = vand.u32 %v1344, 4294901760
        %1346 = vmatmul.f32.gmra.mxu0 %v1345
        %v1347 = vpop.f32.mrf.mxu0
        %v1348 = vadd.f32 0.0, %v1347
        %1349 = vdwg.mxu0
        %1350 = vmatpush.msra.mxu0 0.0
        %1351 = vmatpush.msra.mxu0 0.0
        %1352 = vmatpush.msra.mxu0 0.0
        %1353 = vmatpush.msra.mxu0 0.0
        %1354 = vmatpush.msra.mxu0 0.0
        %1355 = vmatpush.msra.mxu0 0.0
        %1356 = vmatpush.msra.mxu0 0.0
        %1357 = vmatpush.msra.mxu0 0.0
        %1358 = vmatpush.msra.mxu0 0.0
        %1359 = vmatpush.msra.mxu0 0.0
        %v1360 = vand.u32 %v768, 4294901760
        %v1361 = vsub.f32 %v768, %v1360
        %v1362 = vand.u32 %v1361, 4294901760
        %v1363 = vsub.f32 %v1361, %v1362
        %v1364 = vand.u32 %v1363, 4294901760
        %1365 = vmatpush.msra.mxu0 %v1364
        %v1366 = vand.u32 %v760, 4294901760
        %v1367 = vsub.f32 %v760, %v1366
        %v1368 = vand.u32 %v1367, 4294901760
        %v1369 = vsub.f32 %v1367, %v1368
        %v1370 = vand.u32 %v1369, 4294901760
        %1371 = vmatpush.msra.mxu0 %v1370
        %v1372 = vand.u32 %v752, 4294901760
        %v1373 = vsub.f32 %v752, %v1372
        %v1374 = vand.u32 %v1373, 4294901760
        %v1375 = vsub.f32 %v1373, %v1374
        %v1376 = vand.u32 %v1375, 4294901760
        %1377 = vmatpush.msra.mxu0 %v1376
        %v1378 = vand.u32 %v744, 4294901760
        %v1379 = vsub.f32 %v744, %v1378
        %v1380 = vand.u32 %v1379, 4294901760
        %v1381 = vsub.f32 %v1379, %v1380
        %v1382 = vand.u32 %v1381, 4294901760
        %1383 = vmatpush.msra.mxu0 %v1382
        %v1384 = vand.u32 %v736, 4294901760
        %v1385 = vsub.f32 %v736, %v1384
        %v1386 = vand.u32 %v1385, 4294901760
        %v1387 = vsub.f32 %v1385, %v1386
        %v1388 = vand.u32 %v1387, 4294901760
        %1389 = vmatpush.msra.mxu0 %v1388
        %v1390 = vand.u32 %v728, 4294901760
        %v1391 = vsub.f32 %v728, %v1390
        %v1392 = vand.u32 %v1391, 4294901760
        %v1393 = vsub.f32 %v1391, %v1392
        %v1394 = vand.u32 %v1393, 4294901760
        %1395 = vmatpush.msra.mxu0 %v1394
        %v1396 = vand.u32 %v822, 4294901760
        %1397 = vmatmul.f32.gmra.mxu0 %v1396
        %v1398 = vpop.f32.mrf.mxu0
        %v1399 = vadd.f32 %v1340, %v1398
        %v1400 = vand.u32 %v825, 4294901760
        %1401 = vmatmul.f32.gmra.mxu0 %v1400
        %v1402 = vpop.f32.mrf.mxu0
        %v1403 = vadd.f32 %v1348, %v1402
        %1404 = vdwg.mxu0
        %1405 = vmatpush.msra.mxu0 0.0
        %1406 = vmatpush.msra.mxu0 0.0
        %1407 = vmatpush.msra.mxu0 0.0
        %1408 = vmatpush.msra.mxu0 0.0
        %1409 = vmatpush.msra.mxu0 0.0
        %1410 = vmatpush.msra.mxu0 0.0
        %1411 = vmatpush.msra.mxu0 0.0
        %1412 = vmatpush.msra.mxu0 0.0
        %1413 = vmatpush.msra.mxu0 0.0
        %1414 = vmatpush.msra.mxu0 0.0
        %v1415 = vand.u32 %v768, 4294901760
        %v1416 = vsub.f32 %v768, %v1415
        %1417 = vmatpush.msra.mxu0 %v1416
        %v1418 = vand.u32 %v760, 4294901760
        %v1419 = vsub.f32 %v760, %v1418
        %1420 = vmatpush.msra.mxu0 %v1419
        %v1421 = vand.u32 %v752, 4294901760
        %v1422 = vsub.f32 %v752, %v1421
        %1423 = vmatpush.msra.mxu0 %v1422
        %v1424 = vand.u32 %v744, 4294901760
        %v1425 = vsub.f32 %v744, %v1424
        %1426 = vmatpush.msra.mxu0 %v1425
        %v1427 = vand.u32 %v736, 4294901760
        %v1428 = vsub.f32 %v736, %v1427
        %1429 = vmatpush.msra.mxu0 %v1428
        %v1430 = vand.u32 %v728, 4294901760
        %v1431 = vsub.f32 %v728, %v1430
        %1432 = vmatpush.msra.mxu0 %v1431
        %v1433 = vand.u32 %v822, 4294901760
        %v1434 = vsub.f32 %v822, %v1433
        %1435 = vmatmul.f32.gmra.mxu0 %v1434
        %v1436 = vpop.f32.mrf.mxu0
        %v1437 = vadd.f32 %v1399, %v1436
        %v1438 = vand.u32 %v825, 4294901760
        %v1439 = vsub.f32 %v825, %v1438
        %1440 = vmatmul.f32.gmra.mxu0 %v1439
        %v1441 = vpop.f32.mrf.mxu0
        %v1442 = vadd.f32 %v1403, %v1441
        %1443 = vdwg.mxu0
        %1444 = vmatpush.msra.mxu0 0.0
        %1445 = vmatpush.msra.mxu0 0.0
        %1446 = vmatpush.msra.mxu0 0.0
        %1447 = vmatpush.msra.mxu0 0.0
        %1448 = vmatpush.msra.mxu0 0.0
        %1449 = vmatpush.msra.mxu0 0.0
        %1450 = vmatpush.msra.mxu0 0.0
        %1451 = vmatpush.msra.mxu0 0.0
        %1452 = vmatpush.msra.mxu0 0.0
        %1453 = vmatpush.msra.mxu0 0.0
        %v1454 = vand.u32 %v768, 4294901760
        %1455 = vmatpush.msra.mxu0 %v1454
        %v1456 = vand.u32 %v760, 4294901760
        %1457 = vmatpush.msra.mxu0 %v1456
        %v1458 = vand.u32 %v752, 4294901760
        %1459 = vmatpush.msra.mxu0 %v1458
        %v1460 = vand.u32 %v744, 4294901760
        %1461 = vmatpush.msra.mxu0 %v1460
        %v1462 = vand.u32 %v736, 4294901760
        %1463 = vmatpush.msra.mxu0 %v1462
        %v1464 = vand.u32 %v728, 4294901760
        %1465 = vmatpush.msra.mxu0 %v1464
        %v1466 = vand.u32 %v822, 4294901760
        %v1467 = vsub.f32 %v822, %v1466
        %v1468 = vand.u32 %v1467, 4294901760
        %1469 = vmatmul.f32.gmra.mxu0 %v1468
        %v1470 = vpop.f32.mrf.mxu0
        %v1471 = vadd.f32 %v1437, %v1470
        %v1472 = vand.u32 %v825, 4294901760
        %v1473 = vsub.f32 %v825, %v1472
        %v1474 = vand.u32 %v1473, 4294901760
        %1475 = vmatmul.f32.gmra.mxu0 %v1474
        %v1476 = vpop.f32.mrf.mxu0
        %v1477 = vadd.f32 %v1442, %v1476
        %1478 = vdwg.mxu0
        %1479 = vmatpush.msra.mxu0 0.0
        %1480 = vmatpush.msra.mxu0 0.0
        %1481 = vmatpush.msra.mxu0 0.0
        %1482 = vmatpush.msra.mxu0 0.0
        %1483 = vmatpush.msra.mxu0 0.0
        %1484 = vmatpush.msra.mxu0 0.0
        %1485 = vmatpush.msra.mxu0 0.0
        %1486 = vmatpush.msra.mxu0 0.0
        %1487 = vmatpush.msra.mxu0 0.0
        %1488 = vmatpush.msra.mxu0 0.0
        %v1489 = vand.u32 %v768, 4294901760
        %v1490 = vsub.f32 %v768, %v1489
        %v1491 = vand.u32 %v1490, 4294901760
        %1492 = vmatpush.msra.mxu0 %v1491
        %v1493 = vand.u32 %v760, 4294901760
        %v1494 = vsub.f32 %v760, %v1493
        %v1495 = vand.u32 %v1494, 4294901760
        %1496 = vmatpush.msra.mxu0 %v1495
        %v1497 = vand.u32 %v752, 4294901760
        %v1498 = vsub.f32 %v752, %v1497
        %v1499 = vand.u32 %v1498, 4294901760
        %1500 = vmatpush.msra.mxu0 %v1499
        %v1501 = vand.u32 %v744, 4294901760
        %v1502 = vsub.f32 %v744, %v1501
        %v1503 = vand.u32 %v1502, 4294901760
        %1504 = vmatpush.msra.mxu0 %v1503
        %v1505 = vand.u32 %v736, 4294901760
        %v1506 = vsub.f32 %v736, %v1505
        %v1507 = vand.u32 %v1506, 4294901760
        %1508 = vmatpush.msra.mxu0 %v1507
        %v1509 = vand.u32 %v728, 4294901760
        %v1510 = vsub.f32 %v728, %v1509
        %v1511 = vand.u32 %v1510, 4294901760
        %1512 = vmatpush.msra.mxu0 %v1511
        %v1513 = vand.u32 %v822, 4294901760
        %1514 = vmatmul.f32.gmra.mxu0 %v1513
        %v1515 = vpop.f32.mrf.mxu0
        %v1516 = vadd.f32 %v1471, %v1515
        %v1517 = vand.u32 %v825, 4294901760
        %1518 = vmatmul.f32.gmra.mxu0 %v1517
        %v1519 = vpop.f32.mrf.mxu0
        %v1520 = vadd.f32 %v1477, %v1519
        %1521 = vdwg.mxu0
        %1522 = vmatpush.msra.mxu0 0.0
        %1523 = vmatpush.msra.mxu0 0.0
        %1524 = vmatpush.msra.mxu0 0.0
        %1525 = vmatpush.msra.mxu0 0.0
        %1526 = vmatpush.msra.mxu0 0.0
        %1527 = vmatpush.msra.mxu0 0.0
        %1528 = vmatpush.msra.mxu0 0.0
        %1529 = vmatpush.msra.mxu0 0.0
        %1530 = vmatpush.msra.mxu0 0.0
        %1531 = vmatpush.msra.mxu0 0.0
        %v1532 = vand.u32 %v768, 4294901760
        %1533 = vmatpush.msra.mxu0 %v1532
        %v1534 = vand.u32 %v760, 4294901760
        %1535 = vmatpush.msra.mxu0 %v1534
        %v1536 = vand.u32 %v752, 4294901760
        %1537 = vmatpush.msra.mxu0 %v1536
        %v1538 = vand.u32 %v744, 4294901760
        %1539 = vmatpush.msra.mxu0 %v1538
        %v1540 = vand.u32 %v736, 4294901760
        %1541 = vmatpush.msra.mxu0 %v1540
        %v1542 = vand.u32 %v728, 4294901760
        %1543 = vmatpush.msra.mxu0 %v1542
        %v1544 = vand.u32 %v822, 4294901760
        %1545 = vmatmul.f32.gmra.mxu0 %v1544
        %v1546 = vpop.f32.mrf.mxu0
        %v1547 = vadd.f32 %v1516, %v1546
        %v1548 = vand.u32 %v825, 4294901760
        %1549 = vmatmul.f32.gmra.mxu0 %v1548
        %v1550 = vpop.f32.mrf.mxu0
        %v1551 = vadd.f32 %v1520, %v1550
        %1552 = vdwg.mxu0
        %1553 = vmatpush.msra.mxu0 0.0
        %1554 = vmatpush.msra.mxu0 0.0
        %1555 = vmatpush.msra.mxu0 0.0
        %1556 = vmatpush.msra.mxu0 0.0
        %1557 = vmatpush.msra.mxu0 0.0
        %1558 = vmatpush.msra.mxu0 0.0
        %1559 = vmatpush.msra.mxu0 0.0
        %1560 = vmatpush.msra.mxu0 0.0
        %1561 = vmatpush.msra.mxu0 0.0
        %1562 = vmatpush.msra.mxu0 0.0
        %v1563 = vand.u32 %v769, 4294901760
        %1564 = vmatpush.msra.mxu0 %v1563
        %v1565 = vand.u32 %v761, 4294901760
        %1566 = vmatpush.msra.mxu0 %v1565
        %v1567 = vand.u32 %v753, 4294901760
        %1568 = vmatpush.msra.mxu0 %v1567
        %v1569 = vand.u32 %v745, 4294901760
        %1570 = vmatpush.msra.mxu0 %v1569
        %v1571 = vand.u32 %v737, 4294901760
        %1572 = vmatpush.msra.mxu0 %v1571
        %v1573 = vand.u32 %v729, 4294901760
        %1574 = vmatpush.msra.mxu0 %v1573
        %v1575 = vand.u32 %v822, 4294901760
        %v1576 = vsub.f32 %v822, %v1575
        %v1577 = vand.u32 %v1576, 4294901760
        %v1578 = vsub.f32 %v1576, %v1577
        %v1579 = vand.u32 %v1578, 4294901760
        %1580 = vmatmul.f32.gmra.mxu0 %v1579
        %v1581 = vpop.f32.mrf.mxu0
        %v1582 = vadd.f32 0.0, %v1581
        %v1583 = vand.u32 %v825, 4294901760
        %v1584 = vsub.f32 %v825, %v1583
        %v1585 = vand.u32 %v1584, 4294901760
        %v1586 = vsub.f32 %v1584, %v1585
        %v1587 = vand.u32 %v1586, 4294901760
        %1588 = vmatmul.f32.gmra.mxu0 %v1587
        %v1589 = vpop.f32.mrf.mxu0
        %v1590 = vadd.f32 0.0, %v1589
        %1591 = vdwg.mxu0
        %1592 = vmatpush.msra.mxu0 0.0
        %1593 = vmatpush.msra.mxu0 0.0
        %1594 = vmatpush.msra.mxu0 0.0
        %1595 = vmatpush.msra.mxu0 0.0
        %1596 = vmatpush.msra.mxu0 0.0
        %1597 = vmatpush.msra.mxu0 0.0
        %1598 = vmatpush.msra.mxu0 0.0
        %1599 = vmatpush.msra.mxu0 0.0
        %1600 = vmatpush.msra.mxu0 0.0
        %1601 = vmatpush.msra.mxu0 0.0
        %v1602 = vand.u32 %v769, 4294901760
        %v1603 = vsub.f32 %v769, %v1602
        %v1604 = vand.u32 %v1603, 4294901760
        %v1605 = vsub.f32 %v1603, %v1604
        %v1606 = vand.u32 %v1605, 4294901760
        %1607 = vmatpush.msra.mxu0 %v1606
        %v1608 = vand.u32 %v761, 4294901760
        %v1609 = vsub.f32 %v761, %v1608
        %v1610 = vand.u32 %v1609, 4294901760
        %v1611 = vsub.f32 %v1609, %v1610
        %v1612 = vand.u32 %v1611, 4294901760
        %1613 = vmatpush.msra.mxu0 %v1612
        %v1614 = vand.u32 %v753, 4294901760
        %v1615 = vsub.f32 %v753, %v1614
        %v1616 = vand.u32 %v1615, 4294901760
        %v1617 = vsub.f32 %v1615, %v1616
        %v1618 = vand.u32 %v1617, 4294901760
        %1619 = vmatpush.msra.mxu0 %v1618
        %v1620 = vand.u32 %v745, 4294901760
        %v1621 = vsub.f32 %v745, %v1620
        %v1622 = vand.u32 %v1621, 4294901760
        %v1623 = vsub.f32 %v1621, %v1622
        %v1624 = vand.u32 %v1623, 4294901760
        %1625 = vmatpush.msra.mxu0 %v1624
        %v1626 = vand.u32 %v737, 4294901760
        %v1627 = vsub.f32 %v737, %v1626
        %v1628 = vand.u32 %v1627, 4294901760
        %v1629 = vsub.f32 %v1627, %v1628
        %v1630 = vand.u32 %v1629, 4294901760
        %1631 = vmatpush.msra.mxu0 %v1630
        %v1632 = vand.u32 %v729, 4294901760
        %v1633 = vsub.f32 %v729, %v1632
        %v1634 = vand.u32 %v1633, 4294901760
        %v1635 = vsub.f32 %v1633, %v1634
        %v1636 = vand.u32 %v1635, 4294901760
        %1637 = vmatpush.msra.mxu0 %v1636
        %v1638 = vand.u32 %v822, 4294901760
        %1639 = vmatmul.f32.gmra.mxu0 %v1638
        %v1640 = vpop.f32.mrf.mxu0
        %v1641 = vadd.f32 %v1582, %v1640
        %v1642 = vand.u32 %v825, 4294901760
        %1643 = vmatmul.f32.gmra.mxu0 %v1642
        %v1644 = vpop.f32.mrf.mxu0
        %v1645 = vadd.f32 %v1590, %v1644
        %1646 = vdwg.mxu0
        %1647 = vmatpush.msra.mxu0 0.0
        %1648 = vmatpush.msra.mxu0 0.0
        %1649 = vmatpush.msra.mxu0 0.0
        %1650 = vmatpush.msra.mxu0 0.0
        %1651 = vmatpush.msra.mxu0 0.0
        %1652 = vmatpush.msra.mxu0 0.0
        %1653 = vmatpush.msra.mxu0 0.0
        %1654 = vmatpush.msra.mxu0 0.0
        %1655 = vmatpush.msra.mxu0 0.0
        %1656 = vmatpush.msra.mxu0 0.0
        %v1657 = vand.u32 %v769, 4294901760
        %v1658 = vsub.f32 %v769, %v1657
        %1659 = vmatpush.msra.mxu0 %v1658
        %v1660 = vand.u32 %v761, 4294901760
        %v1661 = vsub.f32 %v761, %v1660
        %1662 = vmatpush.msra.mxu0 %v1661
        %v1663 = vand.u32 %v753, 4294901760
        %v1664 = vsub.f32 %v753, %v1663
        %1665 = vmatpush.msra.mxu0 %v1664
        %v1666 = vand.u32 %v745, 4294901760
        %v1667 = vsub.f32 %v745, %v1666
        %1668 = vmatpush.msra.mxu0 %v1667
        %v1669 = vand.u32 %v737, 4294901760
        %v1670 = vsub.f32 %v737, %v1669
        %1671 = vmatpush.msra.mxu0 %v1670
        %v1672 = vand.u32 %v729, 4294901760
        %v1673 = vsub.f32 %v729, %v1672
        %1674 = vmatpush.msra.mxu0 %v1673
        %v1675 = vand.u32 %v822, 4294901760
        %v1676 = vsub.f32 %v822, %v1675
        %1677 = vmatmul.f32.gmra.mxu0 %v1676
        %v1678 = vpop.f32.mrf.mxu0
        %v1679 = vadd.f32 %v1641, %v1678
        %v1680 = vand.u32 %v825, 4294901760
        %v1681 = vsub.f32 %v825, %v1680
        %1682 = vmatmul.f32.gmra.mxu0 %v1681
        %v1683 = vpop.f32.mrf.mxu0
        %v1684 = vadd.f32 %v1645, %v1683
        %1685 = vdwg.mxu0
        %1686 = vmatpush.msra.mxu0 0.0
        %1687 = vmatpush.msra.mxu0 0.0
        %1688 = vmatpush.msra.mxu0 0.0
        %1689 = vmatpush.msra.mxu0 0.0
        %1690 = vmatpush.msra.mxu0 0.0
        %1691 = vmatpush.msra.mxu0 0.0
        %1692 = vmatpush.msra.mxu0 0.0
        %1693 = vmatpush.msra.mxu0 0.0
        %1694 = vmatpush.msra.mxu0 0.0
        %1695 = vmatpush.msra.mxu0 0.0
        %v1696 = vand.u32 %v769, 4294901760
        %1697 = vmatpush.msra.mxu0 %v1696
        %v1698 = vand.u32 %v761, 4294901760
        %1699 = vmatpush.msra.mxu0 %v1698
        %v1700 = vand.u32 %v753, 4294901760
        %1701 = vmatpush.msra.mxu0 %v1700
        %v1702 = vand.u32 %v745, 4294901760
        %1703 = vmatpush.msra.mxu0 %v1702
        %v1704 = vand.u32 %v737, 4294901760
        %1705 = vmatpush.msra.mxu0 %v1704
        %v1706 = vand.u32 %v729, 4294901760
        %1707 = vmatpush.msra.mxu0 %v1706
        %v1708 = vand.u32 %v822, 4294901760
        %v1709 = vsub.f32 %v822, %v1708
        %v1710 = vand.u32 %v1709, 4294901760
        %1711 = vmatmul.f32.gmra.mxu0 %v1710
        %v1712 = vpop.f32.mrf.mxu0
        %v1713 = vadd.f32 %v1679, %v1712
        %v1714 = vand.u32 %v825, 4294901760
        %v1715 = vsub.f32 %v825, %v1714
        %v1716 = vand.u32 %v1715, 4294901760
        %1717 = vmatmul.f32.gmra.mxu0 %v1716
        %v1718 = vpop.f32.mrf.mxu0
        %v1719 = vadd.f32 %v1684, %v1718
        %1720 = vdwg.mxu0
        %1721 = vmatpush.msra.mxu0 0.0
        %1722 = vmatpush.msra.mxu0 0.0
        %1723 = vmatpush.msra.mxu0 0.0
        %1724 = vmatpush.msra.mxu0 0.0
        %1725 = vmatpush.msra.mxu0 0.0
        %1726 = vmatpush.msra.mxu0 0.0
        %1727 = vmatpush.msra.mxu0 0.0
        %1728 = vmatpush.msra.mxu0 0.0
        %1729 = vmatpush.msra.mxu0 0.0
        %1730 = vmatpush.msra.mxu0 0.0
        %v1731 = vand.u32 %v769, 4294901760
        %v1732 = vsub.f32 %v769, %v1731
        %v1733 = vand.u32 %v1732, 4294901760
        %1734 = vmatpush.msra.mxu0 %v1733
        %v1735 = vand.u32 %v761, 4294901760
        %v1736 = vsub.f32 %v761, %v1735
        %v1737 = vand.u32 %v1736, 4294901760
        %1738 = vmatpush.msra.mxu0 %v1737
        %v1739 = vand.u32 %v753, 4294901760
        %v1740 = vsub.f32 %v753, %v1739
        %v1741 = vand.u32 %v1740, 4294901760
        %1742 = vmatpush.msra.mxu0 %v1741
        %v1743 = vand.u32 %v745, 4294901760
        %v1744 = vsub.f32 %v745, %v1743
        %v1745 = vand.u32 %v1744, 4294901760
        %1746 = vmatpush.msra.mxu0 %v1745
        %v1747 = vand.u32 %v737, 4294901760
        %v1748 = vsub.f32 %v737, %v1747
        %v1749 = vand.u32 %v1748, 4294901760
        %1750 = vmatpush.msra.mxu0 %v1749
        %v1751 = vand.u32 %v729, 4294901760
        %v1752 = vsub.f32 %v729, %v1751
        %v1753 = vand.u32 %v1752, 4294901760
        %1754 = vmatpush.msra.mxu0 %v1753
        %v1755 = vand.u32 %v822, 4294901760
        %1756 = vmatmul.f32.gmra.mxu0 %v1755
        %v1757 = vpop.f32.mrf.mxu0
        %v1758 = vadd.f32 %v1713, %v1757
        %v1759 = vand.u32 %v825, 4294901760
        %1760 = vmatmul.f32.gmra.mxu0 %v1759
        %v1761 = vpop.f32.mrf.mxu0
        %v1762 = vadd.f32 %v1719, %v1761
        %1763 = vdwg.mxu0
        %1764 = vmatpush.msra.mxu0 0.0
        %1765 = vmatpush.msra.mxu0 0.0
        %1766 = vmatpush.msra.mxu0 0.0
        %1767 = vmatpush.msra.mxu0 0.0
        %1768 = vmatpush.msra.mxu0 0.0
        %1769 = vmatpush.msra.mxu0 0.0
        %1770 = vmatpush.msra.mxu0 0.0
        %1771 = vmatpush.msra.mxu0 0.0
        %1772 = vmatpush.msra.mxu0 0.0
        %1773 = vmatpush.msra.mxu0 0.0
        %v1774 = vand.u32 %v769, 4294901760
        %1775 = vmatpush.msra.mxu0 %v1774
        %v1776 = vand.u32 %v761, 4294901760
        %1777 = vmatpush.msra.mxu0 %v1776
        %v1778 = vand.u32 %v753, 4294901760
        %1779 = vmatpush.msra.mxu0 %v1778
        %v1780 = vand.u32 %v745, 4294901760
        %1781 = vmatpush.msra.mxu0 %v1780
        %v1782 = vand.u32 %v737, 4294901760
        %1783 = vmatpush.msra.mxu0 %v1782
        %v1784 = vand.u32 %v729, 4294901760
        %1785 = vmatpush.msra.mxu0 %v1784
        %v1786 = vand.u32 %v822, 4294901760
        %1787 = vmatmul.f32.gmra.mxu0 %v1786
        %v1788 = vpop.f32.mrf.mxu0
        %v1789 = vadd.f32 %v1758, %v1788
        %v1790 = vand.u32 %v825, 4294901760
        %1791 = vmatmul.f32.gmra.mxu0 %v1790
        %v1792 = vpop.f32.mrf.mxu0
        %v1793 = vadd.f32 %v1762, %v1792
        %1794 = vdwg.mxu0
        %1795 = vmatpush.msra.mxu0 0.0
        %1796 = vmatpush.msra.mxu0 0.0
        %1797 = vmatpush.msra.mxu0 0.0
        %1798 = vmatpush.msra.mxu0 0.0
        %1799 = vmatpush.msra.mxu0 0.0
        %1800 = vmatpush.msra.mxu0 0.0
        %1801 = vmatpush.msra.mxu0 0.0
        %1802 = vmatpush.msra.mxu0 0.0
        %1803 = vmatpush.msra.mxu0 0.0
        %1804 = vmatpush.msra.mxu0 0.0
        %v1805 = vand.u32 %v770, 4294901760
        %1806 = vmatpush.msra.mxu0 %v1805
        %v1807 = vand.u32 %v762, 4294901760
        %1808 = vmatpush.msra.mxu0 %v1807
        %v1809 = vand.u32 %v754, 4294901760
        %1810 = vmatpush.msra.mxu0 %v1809
        %v1811 = vand.u32 %v746, 4294901760
        %1812 = vmatpush.msra.mxu0 %v1811
        %v1813 = vand.u32 %v738, 4294901760
        %1814 = vmatpush.msra.mxu0 %v1813
        %v1815 = vand.u32 %v730, 4294901760
        %1816 = vmatpush.msra.mxu0 %v1815
        %v1817 = vand.u32 %v822, 4294901760
        %v1818 = vsub.f32 %v822, %v1817
        %v1819 = vand.u32 %v1818, 4294901760
        %v1820 = vsub.f32 %v1818, %v1819
        %v1821 = vand.u32 %v1820, 4294901760
        %1822 = vmatmul.f32.gmra.mxu0 %v1821
        %v1823 = vpop.f32.mrf.mxu0
        %v1824 = vadd.f32 0.0, %v1823
        %v1825 = vand.u32 %v825, 4294901760
        %v1826 = vsub.f32 %v825, %v1825
        %v1827 = vand.u32 %v1826, 4294901760
        %v1828 = vsub.f32 %v1826, %v1827
        %v1829 = vand.u32 %v1828, 4294901760
        %1830 = vmatmul.f32.gmra.mxu0 %v1829
        %v1831 = vpop.f32.mrf.mxu0
        %v1832 = vadd.f32 0.0, %v1831
        %1833 = vdwg.mxu0
        %1834 = vmatpush.msra.mxu0 0.0
        %1835 = vmatpush.msra.mxu0 0.0
        %1836 = vmatpush.msra.mxu0 0.0
        %1837 = vmatpush.msra.mxu0 0.0
        %1838 = vmatpush.msra.mxu0 0.0
        %1839 = vmatpush.msra.mxu0 0.0
        %1840 = vmatpush.msra.mxu0 0.0
        %1841 = vmatpush.msra.mxu0 0.0
        %1842 = vmatpush.msra.mxu0 0.0
        %1843 = vmatpush.msra.mxu0 0.0
        %v1844 = vand.u32 %v770, 4294901760
        %v1845 = vsub.f32 %v770, %v1844
        %v1846 = vand.u32 %v1845, 4294901760
        %v1847 = vsub.f32 %v1845, %v1846
        %v1848 = vand.u32 %v1847, 4294901760
        %1849 = vmatpush.msra.mxu0 %v1848
        %v1850 = vand.u32 %v762, 4294901760
        %v1851 = vsub.f32 %v762, %v1850
        %v1852 = vand.u32 %v1851, 4294901760
        %v1853 = vsub.f32 %v1851, %v1852
        %v1854 = vand.u32 %v1853, 4294901760
        %1855 = vmatpush.msra.mxu0 %v1854
        %v1856 = vand.u32 %v754, 4294901760
        %v1857 = vsub.f32 %v754, %v1856
        %v1858 = vand.u32 %v1857, 4294901760
        %v1859 = vsub.f32 %v1857, %v1858
        %v1860 = vand.u32 %v1859, 4294901760
        %1861 = vmatpush.msra.mxu0 %v1860
        %v1862 = vand.u32 %v746, 4294901760
        %v1863 = vsub.f32 %v746, %v1862
        %v1864 = vand.u32 %v1863, 4294901760
        %v1865 = vsub.f32 %v1863, %v1864
        %v1866 = vand.u32 %v1865, 4294901760
        %1867 = vmatpush.msra.mxu0 %v1866
        %v1868 = vand.u32 %v738, 4294901760
        %v1869 = vsub.f32 %v738, %v1868
        %v1870 = vand.u32 %v1869, 4294901760
        %v1871 = vsub.f32 %v1869, %v1870
        %v1872 = vand.u32 %v1871, 4294901760
        %1873 = vmatpush.msra.mxu0 %v1872
        %v1874 = vand.u32 %v730, 4294901760
        %v1875 = vsub.f32 %v730, %v1874
        %v1876 = vand.u32 %v1875, 4294901760
        %v1877 = vsub.f32 %v1875, %v1876
        %v1878 = vand.u32 %v1877, 4294901760
        %1879 = vmatpush.msra.mxu0 %v1878
        %v1880 = vand.u32 %v822, 4294901760
        %1881 = vmatmul.f32.gmra.mxu0 %v1880
        %v1882 = vpop.f32.mrf.mxu0
        %v1883 = vadd.f32 %v1824, %v1882
        %v1884 = vand.u32 %v825, 4294901760
        %1885 = vmatmul.f32.gmra.mxu0 %v1884
        %v1886 = vpop.f32.mrf.mxu0
        %v1887 = vadd.f32 %v1832, %v1886
        %1888 = vdwg.mxu0
        %1889 = vmatpush.msra.mxu0 0.0
        %1890 = vmatpush.msra.mxu0 0.0
        %1891 = vmatpush.msra.mxu0 0.0
        %1892 = vmatpush.msra.mxu0 0.0
        %1893 = vmatpush.msra.mxu0 0.0
        %1894 = vmatpush.msra.mxu0 0.0
        %1895 = vmatpush.msra.mxu0 0.0
        %1896 = vmatpush.msra.mxu0 0.0
        %1897 = vmatpush.msra.mxu0 0.0
        %1898 = vmatpush.msra.mxu0 0.0
        %v1899 = vand.u32 %v770, 4294901760
        %v1900 = vsub.f32 %v770, %v1899
        %1901 = vmatpush.msra.mxu0 %v1900
        %v1902 = vand.u32 %v762, 4294901760
        %v1903 = vsub.f32 %v762, %v1902
        %1904 = vmatpush.msra.mxu0 %v1903
        %v1905 = vand.u32 %v754, 4294901760
        %v1906 = vsub.f32 %v754, %v1905
        %1907 = vmatpush.msra.mxu0 %v1906
        %v1908 = vand.u32 %v746, 4294901760
        %v1909 = vsub.f32 %v746, %v1908
        %1910 = vmatpush.msra.mxu0 %v1909
        %v1911 = vand.u32 %v738, 4294901760
        %v1912 = vsub.f32 %v738, %v1911
        %1913 = vmatpush.msra.mxu0 %v1912
        %v1914 = vand.u32 %v730, 4294901760
        %v1915 = vsub.f32 %v730, %v1914
        %1916 = vmatpush.msra.mxu0 %v1915
        %v1917 = vand.u32 %v822, 4294901760
        %v1918 = vsub.f32 %v822, %v1917
        %1919 = vmatmul.f32.gmra.mxu0 %v1918
        %v1920 = vpop.f32.mrf.mxu0
        %v1921 = vadd.f32 %v1883, %v1920
        %v1922 = vand.u32 %v825, 4294901760
        %v1923 = vsub.f32 %v825, %v1922
        %1924 = vmatmul.f32.gmra.mxu0 %v1923
        %v1925 = vpop.f32.mrf.mxu0
        %v1926 = vadd.f32 %v1887, %v1925
        %1927 = vdwg.mxu0
        %1928 = vmatpush.msra.mxu0 0.0
        %1929 = vmatpush.msra.mxu0 0.0
        %1930 = vmatpush.msra.mxu0 0.0
        %1931 = vmatpush.msra.mxu0 0.0
        %1932 = vmatpush.msra.mxu0 0.0
        %1933 = vmatpush.msra.mxu0 0.0
        %1934 = vmatpush.msra.mxu0 0.0
        %1935 = vmatpush.msra.mxu0 0.0
        %1936 = vmatpush.msra.mxu0 0.0
        %1937 = vmatpush.msra.mxu0 0.0
        %v1938 = vand.u32 %v770, 4294901760
        %1939 = vmatpush.msra.mxu0 %v1938
        %v1940 = vand.u32 %v762, 4294901760
        %1941 = vmatpush.msra.mxu0 %v1940
        %v1942 = vand.u32 %v754, 4294901760
        %1943 = vmatpush.msra.mxu0 %v1942
        %v1944 = vand.u32 %v746, 4294901760
        %1945 = vmatpush.msra.mxu0 %v1944
        %v1946 = vand.u32 %v738, 4294901760
        %1947 = vmatpush.msra.mxu0 %v1946
        %v1948 = vand.u32 %v730, 4294901760
        %1949 = vmatpush.msra.mxu0 %v1948
        %v1950 = vand.u32 %v822, 4294901760
        %v1951 = vsub.f32 %v822, %v1950
        %v1952 = vand.u32 %v1951, 4294901760
        %1953 = vmatmul.f32.gmra.mxu0 %v1952
        %v1954 = vpop.f32.mrf.mxu0
        %v1955 = vadd.f32 %v1921, %v1954
        %v1956 = vand.u32 %v825, 4294901760
        %v1957 = vsub.f32 %v825, %v1956
        %v1958 = vand.u32 %v1957, 4294901760
        %1959 = vmatmul.f32.gmra.mxu0 %v1958
        %v1960 = vpop.f32.mrf.mxu0
        %v1961 = vadd.f32 %v1926, %v1960
        %1962 = vdwg.mxu0
        %1963 = vmatpush.msra.mxu0 0.0
        %1964 = vmatpush.msra.mxu0 0.0
        %1965 = vmatpush.msra.mxu0 0.0
        %1966 = vmatpush.msra.mxu0 0.0
        %1967 = vmatpush.msra.mxu0 0.0
        %1968 = vmatpush.msra.mxu0 0.0
        %1969 = vmatpush.msra.mxu0 0.0
        %1970 = vmatpush.msra.mxu0 0.0
        %1971 = vmatpush.msra.mxu0 0.0
        %1972 = vmatpush.msra.mxu0 0.0
        %v1973 = vand.u32 %v770, 4294901760
        %v1974 = vsub.f32 %v770, %v1973
        %v1975 = vand.u32 %v1974, 4294901760
        %1976 = vmatpush.msra.mxu0 %v1975
        %v1977 = vand.u32 %v762, 4294901760
        %v1978 = vsub.f32 %v762, %v1977
        %v1979 = vand.u32 %v1978, 4294901760
        %1980 = vmatpush.msra.mxu0 %v1979
        %v1981 = vand.u32 %v754, 4294901760
        %v1982 = vsub.f32 %v754, %v1981
        %v1983 = vand.u32 %v1982, 4294901760
        %1984 = vmatpush.msra.mxu0 %v1983
        %v1985 = vand.u32 %v746, 4294901760
        %v1986 = vsub.f32 %v746, %v1985
        %v1987 = vand.u32 %v1986, 4294901760
        %1988 = vmatpush.msra.mxu0 %v1987
        %v1989 = vand.u32 %v738, 4294901760
        %v1990 = vsub.f32 %v738, %v1989
        %v1991 = vand.u32 %v1990, 4294901760
        %1992 = vmatpush.msra.mxu0 %v1991
        %v1993 = vand.u32 %v730, 4294901760
        %v1994 = vsub.f32 %v730, %v1993
        %v1995 = vand.u32 %v1994, 4294901760
        %1996 = vmatpush.msra.mxu0 %v1995
        %v1997 = vand.u32 %v822, 4294901760
        %1998 = vmatmul.f32.gmra.mxu0 %v1997
        %v1999 = vpop.f32.mrf.mxu0
        %v2000 = vadd.f32 %v1955, %v1999
        %v2001 = vand.u32 %v825, 4294901760
        %2002 = vmatmul.f32.gmra.mxu0 %v2001
        %v2003 = vpop.f32.mrf.mxu0
        %v2004 = vadd.f32 %v1961, %v2003
        %2005 = vdwg.mxu0
        %2006 = vmatpush.msra.mxu0 0.0
        %2007 = vmatpush.msra.mxu0 0.0
        %2008 = vmatpush.msra.mxu0 0.0
        %2009 = vmatpush.msra.mxu0 0.0
        %2010 = vmatpush.msra.mxu0 0.0
        %2011 = vmatpush.msra.mxu0 0.0
        %2012 = vmatpush.msra.mxu0 0.0
        %2013 = vmatpush.msra.mxu0 0.0
        %2014 = vmatpush.msra.mxu0 0.0
        %2015 = vmatpush.msra.mxu0 0.0
        %v2016 = vand.u32 %v770, 4294901760
        %2017 = vmatpush.msra.mxu0 %v2016
        %v2018 = vand.u32 %v762, 4294901760
        %2019 = vmatpush.msra.mxu0 %v2018
        %v2020 = vand.u32 %v754, 4294901760
        %2021 = vmatpush.msra.mxu0 %v2020
        %v2022 = vand.u32 %v746, 4294901760
        %2023 = vmatpush.msra.mxu0 %v2022
        %v2024 = vand.u32 %v738, 4294901760
        %2025 = vmatpush.msra.mxu0 %v2024
        %v2026 = vand.u32 %v730, 4294901760
        %2027 = vmatpush.msra.mxu0 %v2026
        %v2028 = vand.u32 %v822, 4294901760
        %2029 = vmatmul.f32.gmra.mxu0 %v2028
        %v2030 = vpop.f32.mrf.mxu0
        %v2031 = vadd.f32 %v2000, %v2030
        %v2032 = vand.u32 %v825, 4294901760
        %2033 = vmatmul.f32.gmra.mxu0 %v2032
        %v2034 = vpop.f32.mrf.mxu0
        %v2035 = vadd.f32 %v2004, %v2034
        %2036 = vdwg.mxu0
        %2037 = vmatpush.msra.mxu0 0.0
        %2038 = vmatpush.msra.mxu0 0.0
        %2039 = vmatpush.msra.mxu0 0.0
        %2040 = vmatpush.msra.mxu0 0.0
        %2041 = vmatpush.msra.mxu0 0.0
        %2042 = vmatpush.msra.mxu0 0.0
        %2043 = vmatpush.msra.mxu0 0.0
        %2044 = vmatpush.msra.mxu0 0.0
        %2045 = vmatpush.msra.mxu0 0.0
        %2046 = vmatpush.msra.mxu0 0.0
        %v2047 = vand.u32 %v771, 4294901760
        %2048 = vmatpush.msra.mxu0 %v2047
        %v2049 = vand.u32 %v763, 4294901760
        %2050 = vmatpush.msra.mxu0 %v2049
        %v2051 = vand.u32 %v755, 4294901760
        %2052 = vmatpush.msra.mxu0 %v2051
        %v2053 = vand.u32 %v747, 4294901760
        %2054 = vmatpush.msra.mxu0 %v2053
        %v2055 = vand.u32 %v739, 4294901760
        %2056 = vmatpush.msra.mxu0 %v2055
        %v2057 = vand.u32 %v731, 4294901760
        %2058 = vmatpush.msra.mxu0 %v2057
        %v2059 = vand.u32 %v822, 4294901760
        %v2060 = vsub.f32 %v822, %v2059
        %v2061 = vand.u32 %v2060, 4294901760
        %v2062 = vsub.f32 %v2060, %v2061
        %v2063 = vand.u32 %v2062, 4294901760
        %2064 = vmatmul.f32.gmra.mxu0 %v2063
        %v2065 = vpop.f32.mrf.mxu0
        %v2066 = vadd.f32 0.0, %v2065
        %v2067 = vand.u32 %v825, 4294901760
        %v2068 = vsub.f32 %v825, %v2067
        %v2069 = vand.u32 %v2068, 4294901760
        %v2070 = vsub.f32 %v2068, %v2069
        %v2071 = vand.u32 %v2070, 4294901760
        %2072 = vmatmul.f32.gmra.mxu0 %v2071
        %v2073 = vpop.f32.mrf.mxu0
        %v2074 = vadd.f32 0.0, %v2073
        %2075 = vdwg.mxu0
        %2076 = vmatpush.msra.mxu0 0.0
        %2077 = vmatpush.msra.mxu0 0.0
        %2078 = vmatpush.msra.mxu0 0.0
        %2079 = vmatpush.msra.mxu0 0.0
        %2080 = vmatpush.msra.mxu0 0.0
        %2081 = vmatpush.msra.mxu0 0.0
        %2082 = vmatpush.msra.mxu0 0.0
        %2083 = vmatpush.msra.mxu0 0.0
        %2084 = vmatpush.msra.mxu0 0.0
        %2085 = vmatpush.msra.mxu0 0.0
        %v2086 = vand.u32 %v771, 4294901760
        %v2087 = vsub.f32 %v771, %v2086
        %v2088 = vand.u32 %v2087, 4294901760
        %v2089 = vsub.f32 %v2087, %v2088
        %v2090 = vand.u32 %v2089, 4294901760
        %2091 = vmatpush.msra.mxu0 %v2090
        %v2092 = vand.u32 %v763, 4294901760
        %v2093 = vsub.f32 %v763, %v2092
        %v2094 = vand.u32 %v2093, 4294901760
        %v2095 = vsub.f32 %v2093, %v2094
        %v2096 = vand.u32 %v2095, 4294901760
        %2097 = vmatpush.msra.mxu0 %v2096
        %v2098 = vand.u32 %v755, 4294901760
        %v2099 = vsub.f32 %v755, %v2098
        %v2100 = vand.u32 %v2099, 4294901760
        %v2101 = vsub.f32 %v2099, %v2100
        %v2102 = vand.u32 %v2101, 4294901760
        %2103 = vmatpush.msra.mxu0 %v2102
        %v2104 = vand.u32 %v747, 4294901760
        %v2105 = vsub.f32 %v747, %v2104
        %v2106 = vand.u32 %v2105, 4294901760
        %v2107 = vsub.f32 %v2105, %v2106
        %v2108 = vand.u32 %v2107, 4294901760
        %2109 = vmatpush.msra.mxu0 %v2108
        %v2110 = vand.u32 %v739, 4294901760
        %v2111 = vsub.f32 %v739, %v2110
        %v2112 = vand.u32 %v2111, 4294901760
        %v2113 = vsub.f32 %v2111, %v2112
        %v2114 = vand.u32 %v2113, 4294901760
        %2115 = vmatpush.msra.mxu0 %v2114
        %v2116 = vand.u32 %v731, 4294901760
        %v2117 = vsub.f32 %v731, %v2116
        %v2118 = vand.u32 %v2117, 4294901760
        %v2119 = vsub.f32 %v2117, %v2118
        %v2120 = vand.u32 %v2119, 4294901760
        %2121 = vmatpush.msra.mxu0 %v2120
        %v2122 = vand.u32 %v822, 4294901760
        %2123 = vmatmul.f32.gmra.mxu0 %v2122
        %v2124 = vpop.f32.mrf.mxu0
        %v2125 = vadd.f32 %v2066, %v2124
        %v2126 = vand.u32 %v825, 4294901760
        %2127 = vmatmul.f32.gmra.mxu0 %v2126
        %v2128 = vpop.f32.mrf.mxu0
        %v2129 = vadd.f32 %v2074, %v2128
        %2130 = vdwg.mxu0
        %2131 = vmatpush.msra.mxu0 0.0
        %2132 = vmatpush.msra.mxu0 0.0
        %2133 = vmatpush.msra.mxu0 0.0
        %2134 = vmatpush.msra.mxu0 0.0
        %2135 = vmatpush.msra.mxu0 0.0
        %2136 = vmatpush.msra.mxu0 0.0
        %2137 = vmatpush.msra.mxu0 0.0
        %2138 = vmatpush.msra.mxu0 0.0
        %2139 = vmatpush.msra.mxu0 0.0
        %2140 = vmatpush.msra.mxu0 0.0
        %v2141 = vand.u32 %v771, 4294901760
        %v2142 = vsub.f32 %v771, %v2141
        %2143 = vmatpush.msra.mxu0 %v2142
        %v2144 = vand.u32 %v763, 4294901760
        %v2145 = vsub.f32 %v763, %v2144
        %2146 = vmatpush.msra.mxu0 %v2145
        %v2147 = vand.u32 %v755, 4294901760
        %v2148 = vsub.f32 %v755, %v2147
        %2149 = vmatpush.msra.mxu0 %v2148
        %v2150 = vand.u32 %v747, 4294901760
        %v2151 = vsub.f32 %v747, %v2150
        %2152 = vmatpush.msra.mxu0 %v2151
        %v2153 = vand.u32 %v739, 4294901760
        %v2154 = vsub.f32 %v739, %v2153
        %2155 = vmatpush.msra.mxu0 %v2154
        %v2156 = vand.u32 %v731, 4294901760
        %v2157 = vsub.f32 %v731, %v2156
        %2158 = vmatpush.msra.mxu0 %v2157
        %v2159 = vand.u32 %v822, 4294901760
        %v2160 = vsub.f32 %v822, %v2159
        %2161 = vmatmul.f32.gmra.mxu0 %v2160
        %v2162 = vpop.f32.mrf.mxu0
        %v2163 = vadd.f32 %v2125, %v2162
        %v2164 = vand.u32 %v825, 4294901760
        %v2165 = vsub.f32 %v825, %v2164
        %2166 = vmatmul.f32.gmra.mxu0 %v2165
        %v2167 = vpop.f32.mrf.mxu0
        %v2168 = vadd.f32 %v2129, %v2167
        %2169 = vdwg.mxu0
        %2170 = vmatpush.msra.mxu0 0.0
        %2171 = vmatpush.msra.mxu0 0.0
        %2172 = vmatpush.msra.mxu0 0.0
        %2173 = vmatpush.msra.mxu0 0.0
        %2174 = vmatpush.msra.mxu0 0.0
        %2175 = vmatpush.msra.mxu0 0.0
        %2176 = vmatpush.msra.mxu0 0.0
        %2177 = vmatpush.msra.mxu0 0.0
        %2178 = vmatpush.msra.mxu0 0.0
        %2179 = vmatpush.msra.mxu0 0.0
        %v2180 = vand.u32 %v771, 4294901760
        %2181 = vmatpush.msra.mxu0 %v2180
        %v2182 = vand.u32 %v763, 4294901760
        %2183 = vmatpush.msra.mxu0 %v2182
        %v2184 = vand.u32 %v755, 4294901760
        %2185 = vmatpush.msra.mxu0 %v2184
        %v2186 = vand.u32 %v747, 4294901760
        %2187 = vmatpush.msra.mxu0 %v2186
        %v2188 = vand.u32 %v739, 4294901760
        %2189 = vmatpush.msra.mxu0 %v2188
        %v2190 = vand.u32 %v731, 4294901760
        %2191 = vmatpush.msra.mxu0 %v2190
        %v2192 = vand.u32 %v822, 4294901760
        %v2193 = vsub.f32 %v822, %v2192
        %v2194 = vand.u32 %v2193, 4294901760
        %2195 = vmatmul.f32.gmra.mxu0 %v2194
        %v2196 = vpop.f32.mrf.mxu0
        %v2197 = vadd.f32 %v2163, %v2196
        %v2198 = vand.u32 %v825, 4294901760
        %v2199 = vsub.f32 %v825, %v2198
        %v2200 = vand.u32 %v2199, 4294901760
        %2201 = vmatmul.f32.gmra.mxu0 %v2200
        %v2202 = vpop.f32.mrf.mxu0
        %v2203 = vadd.f32 %v2168, %v2202
        %2204 = vdwg.mxu0
        %2205 = vmatpush.msra.mxu0 0.0
        %2206 = vmatpush.msra.mxu0 0.0
        %2207 = vmatpush.msra.mxu0 0.0
        %2208 = vmatpush.msra.mxu0 0.0
        %2209 = vmatpush.msra.mxu0 0.0
        %2210 = vmatpush.msra.mxu0 0.0
        %2211 = vmatpush.msra.mxu0 0.0
        %2212 = vmatpush.msra.mxu0 0.0
        %2213 = vmatpush.msra.mxu0 0.0
        %2214 = vmatpush.msra.mxu0 0.0
        %v2215 = vand.u32 %v771, 4294901760
        %v2216 = vsub.f32 %v771, %v2215
        %v2217 = vand.u32 %v2216, 4294901760
        %2218 = vmatpush.msra.mxu0 %v2217
        %v2219 = vand.u32 %v763, 4294901760
        %v2220 = vsub.f32 %v763, %v2219
        %v2221 = vand.u32 %v2220, 4294901760
        %2222 = vmatpush.msra.mxu0 %v2221
        %v2223 = vand.u32 %v755, 4294901760
        %v2224 = vsub.f32 %v755, %v2223
        %v2225 = vand.u32 %v2224, 4294901760
        %2226 = vmatpush.msra.mxu0 %v2225
        %v2227 = vand.u32 %v747, 4294901760
        %v2228 = vsub.f32 %v747, %v2227
        %v2229 = vand.u32 %v2228, 4294901760
        %2230 = vmatpush.msra.mxu0 %v2229
        %v2231 = vand.u32 %v739, 4294901760
        %v2232 = vsub.f32 %v739, %v2231
        %v2233 = vand.u32 %v2232, 4294901760
        %2234 = vmatpush.msra.mxu0 %v2233
        %v2235 = vand.u32 %v731, 4294901760
        %v2236 = vsub.f32 %v731, %v2235
        %v2237 = vand.u32 %v2236, 4294901760
        %2238 = vmatpush.msra.mxu0 %v2237
        %v2239 = vand.u32 %v822, 4294901760
        %2240 = vmatmul.f32.gmra.mxu0 %v2239
        %v2241 = vpop.f32.mrf.mxu0
        %v2242 = vadd.f32 %v2197, %v2241
        %v2243 = vand.u32 %v825, 4294901760
        %2244 = vmatmul.f32.gmra.mxu0 %v2243
        %v2245 = vpop.f32.mrf.mxu0
        %v2246 = vadd.f32 %v2203, %v2245
        %2247 = vdwg.mxu0
        %2248 = vmatpush.msra.mxu0 0.0
        %2249 = vmatpush.msra.mxu0 0.0
        %2250 = vmatpush.msra.mxu0 0.0
        %2251 = vmatpush.msra.mxu0 0.0
        %2252 = vmatpush.msra.mxu0 0.0
        %2253 = vmatpush.msra.mxu0 0.0
        %2254 = vmatpush.msra.mxu0 0.0
        %2255 = vmatpush.msra.mxu0 0.0
        %2256 = vmatpush.msra.mxu0 0.0
        %2257 = vmatpush.msra.mxu0 0.0
        %v2258 = vand.u32 %v771, 4294901760
        %2259 = vmatpush.msra.mxu0 %v2258
        %v2260 = vand.u32 %v763, 4294901760
        %2261 = vmatpush.msra.mxu0 %v2260
        %v2262 = vand.u32 %v755, 4294901760
        %2263 = vmatpush.msra.mxu0 %v2262
        %v2264 = vand.u32 %v747, 4294901760
        %2265 = vmatpush.msra.mxu0 %v2264
        %v2266 = vand.u32 %v739, 4294901760
        %2267 = vmatpush.msra.mxu0 %v2266
        %v2268 = vand.u32 %v731, 4294901760
        %2269 = vmatpush.msra.mxu0 %v2268
        %v2270 = vand.u32 %v822, 4294901760
        %2271 = vmatmul.f32.gmra.mxu0 %v2270
        %v2272 = vpop.f32.mrf.mxu0
        %v2273 = vadd.f32 %v2242, %v2272
        %v2274 = vand.u32 %v825, 4294901760
        %2275 = vmatmul.f32.gmra.mxu0 %v2274
        %v2276 = vpop.f32.mrf.mxu0
        %v2277 = vadd.f32 %v2246, %v2276
        %2278 = vdwg.mxu0
        %2279 = vmatpush.msra.mxu0 0.0
        %2280 = vmatpush.msra.mxu0 0.0
        %2281 = vmatpush.msra.mxu0 0.0
        %2282 = vmatpush.msra.mxu0 0.0
        %2283 = vmatpush.msra.mxu0 0.0
        %2284 = vmatpush.msra.mxu0 0.0
        %2285 = vmatpush.msra.mxu0 0.0
        %2286 = vmatpush.msra.mxu0 0.0
        %2287 = vmatpush.msra.mxu0 0.0
        %2288 = vmatpush.msra.mxu0 0.0
        %v2289 = vand.u32 %v772, 4294901760
        %2290 = vmatpush.msra.mxu0 %v2289
        %v2291 = vand.u32 %v764, 4294901760
        %2292 = vmatpush.msra.mxu0 %v2291
        %v2293 = vand.u32 %v756, 4294901760
        %2294 = vmatpush.msra.mxu0 %v2293
        %v2295 = vand.u32 %v748, 4294901760
        %2296 = vmatpush.msra.mxu0 %v2295
        %v2297 = vand.u32 %v740, 4294901760
        %2298 = vmatpush.msra.mxu0 %v2297
        %v2299 = vand.u32 %v732, 4294901760
        %2300 = vmatpush.msra.mxu0 %v2299
        %v2301 = vand.u32 %v822, 4294901760
        %v2302 = vsub.f32 %v822, %v2301
        %v2303 = vand.u32 %v2302, 4294901760
        %v2304 = vsub.f32 %v2302, %v2303
        %v2305 = vand.u32 %v2304, 4294901760
        %2306 = vmatmul.f32.gmra.mxu0 %v2305
        %v2307 = vpop.f32.mrf.mxu0
        %v2308 = vadd.f32 0.0, %v2307
        %v2309 = vand.u32 %v825, 4294901760
        %v2310 = vsub.f32 %v825, %v2309
        %v2311 = vand.u32 %v2310, 4294901760
        %v2312 = vsub.f32 %v2310, %v2311
        %v2313 = vand.u32 %v2312, 4294901760
        %2314 = vmatmul.f32.gmra.mxu0 %v2313
        %v2315 = vpop.f32.mrf.mxu0
        %v2316 = vadd.f32 0.0, %v2315
        %2317 = vdwg.mxu0
        %2318 = vmatpush.msra.mxu0 0.0
        %2319 = vmatpush.msra.mxu0 0.0
        %2320 = vmatpush.msra.mxu0 0.0
        %2321 = vmatpush.msra.mxu0 0.0
        %2322 = vmatpush.msra.mxu0 0.0
        %2323 = vmatpush.msra.mxu0 0.0
        %2324 = vmatpush.msra.mxu0 0.0
        %2325 = vmatpush.msra.mxu0 0.0
        %2326 = vmatpush.msra.mxu0 0.0
        %2327 = vmatpush.msra.mxu0 0.0
        %v2328 = vand.u32 %v772, 4294901760
        %v2329 = vsub.f32 %v772, %v2328
        %v2330 = vand.u32 %v2329, 4294901760
        %v2331 = vsub.f32 %v2329, %v2330
        %v2332 = vand.u32 %v2331, 4294901760
        %2333 = vmatpush.msra.mxu0 %v2332
        %v2334 = vand.u32 %v764, 4294901760
        %v2335 = vsub.f32 %v764, %v2334
        %v2336 = vand.u32 %v2335, 4294901760
        %v2337 = vsub.f32 %v2335, %v2336
        %v2338 = vand.u32 %v2337, 4294901760
        %2339 = vmatpush.msra.mxu0 %v2338
        %v2340 = vand.u32 %v756, 4294901760
        %v2341 = vsub.f32 %v756, %v2340
        %v2342 = vand.u32 %v2341, 4294901760
        %v2343 = vsub.f32 %v2341, %v2342
        %v2344 = vand.u32 %v2343, 4294901760
        %2345 = vmatpush.msra.mxu0 %v2344
        %v2346 = vand.u32 %v748, 4294901760
        %v2347 = vsub.f32 %v748, %v2346
        %v2348 = vand.u32 %v2347, 4294901760
        %v2349 = vsub.f32 %v2347, %v2348
        %v2350 = vand.u32 %v2349, 4294901760
        %2351 = vmatpush.msra.mxu0 %v2350
        %v2352 = vand.u32 %v740, 4294901760
        %v2353 = vsub.f32 %v740, %v2352
        %v2354 = vand.u32 %v2353, 4294901760
        %v2355 = vsub.f32 %v2353, %v2354
        %v2356 = vand.u32 %v2355, 4294901760
        %2357 = vmatpush.msra.mxu0 %v2356
        %v2358 = vand.u32 %v732, 4294901760
        %v2359 = vsub.f32 %v732, %v2358
        %v2360 = vand.u32 %v2359, 4294901760
        %v2361 = vsub.f32 %v2359, %v2360
        %v2362 = vand.u32 %v2361, 4294901760
        %2363 = vmatpush.msra.mxu0 %v2362
        %v2364 = vand.u32 %v822, 4294901760
        %2365 = vmatmul.f32.gmra.mxu0 %v2364
        %v2366 = vpop.f32.mrf.mxu0
        %v2367 = vadd.f32 %v2308, %v2366
        %v2368 = vand.u32 %v825, 4294901760
        %2369 = vmatmul.f32.gmra.mxu0 %v2368
        %v2370 = vpop.f32.mrf.mxu0
        %v2371 = vadd.f32 %v2316, %v2370
        %2372 = vdwg.mxu0
        %2373 = vmatpush.msra.mxu0 0.0
        %2374 = vmatpush.msra.mxu0 0.0
        %2375 = vmatpush.msra.mxu0 0.0
        %2376 = vmatpush.msra.mxu0 0.0
        %2377 = vmatpush.msra.mxu0 0.0
        %2378 = vmatpush.msra.mxu0 0.0
        %2379 = vmatpush.msra.mxu0 0.0
        %2380 = vmatpush.msra.mxu0 0.0
        %2381 = vmatpush.msra.mxu0 0.0
        %2382 = vmatpush.msra.mxu0 0.0
        %v2383 = vand.u32 %v772, 4294901760
        %v2384 = vsub.f32 %v772, %v2383
        %2385 = vmatpush.msra.mxu0 %v2384
        %v2386 = vand.u32 %v764, 4294901760
        %v2387 = vsub.f32 %v764, %v2386
        %2388 = vmatpush.msra.mxu0 %v2387
        %v2389 = vand.u32 %v756, 4294901760
        %v2390 = vsub.f32 %v756, %v2389
        %2391 = vmatpush.msra.mxu0 %v2390
        %v2392 = vand.u32 %v748, 4294901760
        %v2393 = vsub.f32 %v748, %v2392
        %2394 = vmatpush.msra.mxu0 %v2393
        %v2395 = vand.u32 %v740, 4294901760
        %v2396 = vsub.f32 %v740, %v2395
        %2397 = vmatpush.msra.mxu0 %v2396
        %v2398 = vand.u32 %v732, 4294901760
        %v2399 = vsub.f32 %v732, %v2398
        %2400 = vmatpush.msra.mxu0 %v2399
        %v2401 = vand.u32 %v822, 4294901760
        %v2402 = vsub.f32 %v822, %v2401
        %2403 = vmatmul.f32.gmra.mxu0 %v2402
        %v2404 = vpop.f32.mrf.mxu0
        %v2405 = vadd.f32 %v2367, %v2404
        %v2406 = vand.u32 %v825, 4294901760
        %v2407 = vsub.f32 %v825, %v2406
        %2408 = vmatmul.f32.gmra.mxu0 %v2407
        %v2409 = vpop.f32.mrf.mxu0
        %v2410 = vadd.f32 %v2371, %v2409
        %2411 = vdwg.mxu0
        %2412 = vmatpush.msra.mxu0 0.0
        %2413 = vmatpush.msra.mxu0 0.0
        %2414 = vmatpush.msra.mxu0 0.0
        %2415 = vmatpush.msra.mxu0 0.0
        %2416 = vmatpush.msra.mxu0 0.0
        %2417 = vmatpush.msra.mxu0 0.0
        %2418 = vmatpush.msra.mxu0 0.0
        %2419 = vmatpush.msra.mxu0 0.0
        %2420 = vmatpush.msra.mxu0 0.0
        %2421 = vmatpush.msra.mxu0 0.0
        %v2422 = vand.u32 %v772, 4294901760
        %2423 = vmatpush.msra.mxu0 %v2422
        %v2424 = vand.u32 %v764, 4294901760
        %2425 = vmatpush.msra.mxu0 %v2424
        %v2426 = vand.u32 %v756, 4294901760
        %2427 = vmatpush.msra.mxu0 %v2426
        %v2428 = vand.u32 %v748, 4294901760
        %2429 = vmatpush.msra.mxu0 %v2428
        %v2430 = vand.u32 %v740, 4294901760
        %2431 = vmatpush.msra.mxu0 %v2430
        %v2432 = vand.u32 %v732, 4294901760
        %2433 = vmatpush.msra.mxu0 %v2432
        %v2434 = vand.u32 %v822, 4294901760
        %v2435 = vsub.f32 %v822, %v2434
        %v2436 = vand.u32 %v2435, 4294901760
        %2437 = vmatmul.f32.gmra.mxu0 %v2436
        %v2438 = vpop.f32.mrf.mxu0
        %v2439 = vadd.f32 %v2405, %v2438
        %v2440 = vand.u32 %v825, 4294901760
        %v2441 = vsub.f32 %v825, %v2440
        %v2442 = vand.u32 %v2441, 4294901760
        %2443 = vmatmul.f32.gmra.mxu0 %v2442
        %v2444 = vpop.f32.mrf.mxu0
        %v2445 = vadd.f32 %v2410, %v2444
        %2446 = vdwg.mxu0
        %2447 = vmatpush.msra.mxu0 0.0
        %2448 = vmatpush.msra.mxu0 0.0
        %2449 = vmatpush.msra.mxu0 0.0
        %2450 = vmatpush.msra.mxu0 0.0
        %2451 = vmatpush.msra.mxu0 0.0
        %2452 = vmatpush.msra.mxu0 0.0
        %2453 = vmatpush.msra.mxu0 0.0
        %2454 = vmatpush.msra.mxu0 0.0
        %2455 = vmatpush.msra.mxu0 0.0
        %2456 = vmatpush.msra.mxu0 0.0
        %v2457 = vand.u32 %v772, 4294901760
        %v2458 = vsub.f32 %v772, %v2457
        %v2459 = vand.u32 %v2458, 4294901760
        %2460 = vmatpush.msra.mxu0 %v2459
        %v2461 = vand.u32 %v764, 4294901760
        %v2462 = vsub.f32 %v764, %v2461
        %v2463 = vand.u32 %v2462, 4294901760
        %2464 = vmatpush.msra.mxu0 %v2463
        %v2465 = vand.u32 %v756, 4294901760
        %v2466 = vsub.f32 %v756, %v2465
        %v2467 = vand.u32 %v2466, 4294901760
        %2468 = vmatpush.msra.mxu0 %v2467
        %v2469 = vand.u32 %v748, 4294901760
        %v2470 = vsub.f32 %v748, %v2469
        %v2471 = vand.u32 %v2470, 4294901760
        %2472 = vmatpush.msra.mxu0 %v2471
        %v2473 = vand.u32 %v740, 4294901760
        %v2474 = vsub.f32 %v740, %v2473
        %v2475 = vand.u32 %v2474, 4294901760
        %2476 = vmatpush.msra.mxu0 %v2475
        %v2477 = vand.u32 %v732, 4294901760
        %v2478 = vsub.f32 %v732, %v2477
        %v2479 = vand.u32 %v2478, 4294901760
        %2480 = vmatpush.msra.mxu0 %v2479
        %v2481 = vand.u32 %v822, 4294901760
        %2482 = vmatmul.f32.gmra.mxu0 %v2481
        %v2483 = vpop.f32.mrf.mxu0
        %v2484 = vadd.f32 %v2439, %v2483
        %v2485 = vand.u32 %v825, 4294901760
        %2486 = vmatmul.f32.gmra.mxu0 %v2485
        %v2487 = vpop.f32.mrf.mxu0
        %v2488 = vadd.f32 %v2445, %v2487
        %2489 = vdwg.mxu0
        %2490 = vmatpush.msra.mxu0 0.0
        %2491 = vmatpush.msra.mxu0 0.0
        %2492 = vmatpush.msra.mxu0 0.0
        %2493 = vmatpush.msra.mxu0 0.0
        %2494 = vmatpush.msra.mxu0 0.0
        %2495 = vmatpush.msra.mxu0 0.0
        %2496 = vmatpush.msra.mxu0 0.0
        %2497 = vmatpush.msra.mxu0 0.0
        %2498 = vmatpush.msra.mxu0 0.0
        %2499 = vmatpush.msra.mxu0 0.0
        %v2500 = vand.u32 %v772, 4294901760
        %2501 = vmatpush.msra.mxu0 %v2500
        %v2502 = vand.u32 %v764, 4294901760
        %2503 = vmatpush.msra.mxu0 %v2502
        %v2504 = vand.u32 %v756, 4294901760
        %2505 = vmatpush.msra.mxu0 %v2504
        %v2506 = vand.u32 %v748, 4294901760
        %2507 = vmatpush.msra.mxu0 %v2506
        %v2508 = vand.u32 %v740, 4294901760
        %2509 = vmatpush.msra.mxu0 %v2508
        %v2510 = vand.u32 %v732, 4294901760
        %2511 = vmatpush.msra.mxu0 %v2510
        %v2512 = vand.u32 %v822, 4294901760
        %2513 = vmatmul.f32.gmra.mxu0 %v2512
        %v2514 = vpop.f32.mrf.mxu0
        %v2515 = vadd.f32 %v2484, %v2514
        %v2516 = vand.u32 %v825, 4294901760
        %2517 = vmatmul.f32.gmra.mxu0 %v2516
        %v2518 = vpop.f32.mrf.mxu0
        %v2519 = vadd.f32 %v2488, %v2518
        %2520 = vdwg.mxu0
        %2521 = vmatpush.msra.mxu0 0.0
        %2522 = vmatpush.msra.mxu0 0.0
        %2523 = vmatpush.msra.mxu0 0.0
        %2524 = vmatpush.msra.mxu0 0.0
        %2525 = vmatpush.msra.mxu0 0.0
        %2526 = vmatpush.msra.mxu0 0.0
        %2527 = vmatpush.msra.mxu0 0.0
        %2528 = vmatpush.msra.mxu0 0.0
        %2529 = vmatpush.msra.mxu0 0.0
        %2530 = vmatpush.msra.mxu0 0.0
        %v2531 = vand.u32 %v773, 4294901760
        %2532 = vmatpush.msra.mxu0 %v2531
        %v2533 = vand.u32 %v765, 4294901760
        %2534 = vmatpush.msra.mxu0 %v2533
        %v2535 = vand.u32 %v757, 4294901760
        %2536 = vmatpush.msra.mxu0 %v2535
        %v2537 = vand.u32 %v749, 4294901760
        %2538 = vmatpush.msra.mxu0 %v2537
        %v2539 = vand.u32 %v741, 4294901760
        %2540 = vmatpush.msra.mxu0 %v2539
        %v2541 = vand.u32 %v733, 4294901760
        %2542 = vmatpush.msra.mxu0 %v2541
        %v2543 = vand.u32 %v822, 4294901760
        %v2544 = vsub.f32 %v822, %v2543
        %v2545 = vand.u32 %v2544, 4294901760
        %v2546 = vsub.f32 %v2544, %v2545
        %v2547 = vand.u32 %v2546, 4294901760
        %2548 = vmatmul.f32.gmra.mxu0 %v2547
        %v2549 = vpop.f32.mrf.mxu0
        %v2550 = vadd.f32 0.0, %v2549
        %v2551 = vand.u32 %v825, 4294901760
        %v2552 = vsub.f32 %v825, %v2551
        %v2553 = vand.u32 %v2552, 4294901760
        %v2554 = vsub.f32 %v2552, %v2553
        %v2555 = vand.u32 %v2554, 4294901760
        %2556 = vmatmul.f32.gmra.mxu0 %v2555
        %v2557 = vpop.f32.mrf.mxu0
        %v2558 = vadd.f32 0.0, %v2557
        %2559 = vdwg.mxu0
        %2560 = vmatpush.msra.mxu0 0.0
        %2561 = vmatpush.msra.mxu0 0.0
        %2562 = vmatpush.msra.mxu0 0.0
        %2563 = vmatpush.msra.mxu0 0.0
        %2564 = vmatpush.msra.mxu0 0.0
        %2565 = vmatpush.msra.mxu0 0.0
        %2566 = vmatpush.msra.mxu0 0.0
        %2567 = vmatpush.msra.mxu0 0.0
        %2568 = vmatpush.msra.mxu0 0.0
        %2569 = vmatpush.msra.mxu0 0.0
        %v2570 = vand.u32 %v773, 4294901760
        %v2571 = vsub.f32 %v773, %v2570
        %v2572 = vand.u32 %v2571, 4294901760
        %v2573 = vsub.f32 %v2571, %v2572
        %v2574 = vand.u32 %v2573, 4294901760
        %2575 = vmatpush.msra.mxu0 %v2574
        %v2576 = vand.u32 %v765, 4294901760
        %v2577 = vsub.f32 %v765, %v2576
        %v2578 = vand.u32 %v2577, 4294901760
        %v2579 = vsub.f32 %v2577, %v2578
        %v2580 = vand.u32 %v2579, 4294901760
        %2581 = vmatpush.msra.mxu0 %v2580
        %v2582 = vand.u32 %v757, 4294901760
        %v2583 = vsub.f32 %v757, %v2582
        %v2584 = vand.u32 %v2583, 4294901760
        %v2585 = vsub.f32 %v2583, %v2584
        %v2586 = vand.u32 %v2585, 4294901760
        %2587 = vmatpush.msra.mxu0 %v2586
        %v2588 = vand.u32 %v749, 4294901760
        %v2589 = vsub.f32 %v749, %v2588
        %v2590 = vand.u32 %v2589, 4294901760
        %v2591 = vsub.f32 %v2589, %v2590
        %v2592 = vand.u32 %v2591, 4294901760
        %2593 = vmatpush.msra.mxu0 %v2592
        %v2594 = vand.u32 %v741, 4294901760
        %v2595 = vsub.f32 %v741, %v2594
        %v2596 = vand.u32 %v2595, 4294901760
        %v2597 = vsub.f32 %v2595, %v2596
        %v2598 = vand.u32 %v2597, 4294901760
        %2599 = vmatpush.msra.mxu0 %v2598
        %v2600 = vand.u32 %v733, 4294901760
        %v2601 = vsub.f32 %v733, %v2600
        %v2602 = vand.u32 %v2601, 4294901760
        %v2603 = vsub.f32 %v2601, %v2602
        %v2604 = vand.u32 %v2603, 4294901760
        %2605 = vmatpush.msra.mxu0 %v2604
        %v2606 = vand.u32 %v822, 4294901760
        %2607 = vmatmul.f32.gmra.mxu0 %v2606
        %v2608 = vpop.f32.mrf.mxu0
        %v2609 = vadd.f32 %v2550, %v2608
        %v2610 = vand.u32 %v825, 4294901760
        %2611 = vmatmul.f32.gmra.mxu0 %v2610
        %v2612 = vpop.f32.mrf.mxu0
        %v2613 = vadd.f32 %v2558, %v2612
        %2614 = vdwg.mxu0
        %2615 = vmatpush.msra.mxu0 0.0
        %2616 = vmatpush.msra.mxu0 0.0
        %2617 = vmatpush.msra.mxu0 0.0
        %2618 = vmatpush.msra.mxu0 0.0
        %2619 = vmatpush.msra.mxu0 0.0
        %2620 = vmatpush.msra.mxu0 0.0
        %2621 = vmatpush.msra.mxu0 0.0
        %2622 = vmatpush.msra.mxu0 0.0
        %2623 = vmatpush.msra.mxu0 0.0
        %2624 = vmatpush.msra.mxu0 0.0
        %v2625 = vand.u32 %v773, 4294901760
        %v2626 = vsub.f32 %v773, %v2625
        %2627 = vmatpush.msra.mxu0 %v2626
        %v2628 = vand.u32 %v765, 4294901760
        %v2629 = vsub.f32 %v765, %v2628
        %2630 = vmatpush.msra.mxu0 %v2629
        %v2631 = vand.u32 %v757, 4294901760
        %v2632 = vsub.f32 %v757, %v2631
        %2633 = vmatpush.msra.mxu0 %v2632
        %v2634 = vand.u32 %v749, 4294901760
        %v2635 = vsub.f32 %v749, %v2634
        %2636 = vmatpush.msra.mxu0 %v2635
        %v2637 = vand.u32 %v741, 4294901760
        %v2638 = vsub.f32 %v741, %v2637
        %2639 = vmatpush.msra.mxu0 %v2638
        %v2640 = vand.u32 %v733, 4294901760
        %v2641 = vsub.f32 %v733, %v2640
        %2642 = vmatpush.msra.mxu0 %v2641
        %v2643 = vand.u32 %v822, 4294901760
        %v2644 = vsub.f32 %v822, %v2643
        %2645 = vmatmul.f32.gmra.mxu0 %v2644
        %v2646 = vpop.f32.mrf.mxu0
        %v2647 = vadd.f32 %v2609, %v2646
        %v2648 = vand.u32 %v825, 4294901760
        %v2649 = vsub.f32 %v825, %v2648
        %2650 = vmatmul.f32.gmra.mxu0 %v2649
        %v2651 = vpop.f32.mrf.mxu0
        %v2652 = vadd.f32 %v2613, %v2651
        %2653 = vdwg.mxu0
        %2654 = vmatpush.msra.mxu0 0.0
        %2655 = vmatpush.msra.mxu0 0.0
        %2656 = vmatpush.msra.mxu0 0.0
        %2657 = vmatpush.msra.mxu0 0.0
        %2658 = vmatpush.msra.mxu0 0.0
        %2659 = vmatpush.msra.mxu0 0.0
        %2660 = vmatpush.msra.mxu0 0.0
        %2661 = vmatpush.msra.mxu0 0.0
        %2662 = vmatpush.msra.mxu0 0.0
        %2663 = vmatpush.msra.mxu0 0.0
        %v2664 = vand.u32 %v773, 4294901760
        %2665 = vmatpush.msra.mxu0 %v2664
        %v2666 = vand.u32 %v765, 4294901760
        %2667 = vmatpush.msra.mxu0 %v2666
        %v2668 = vand.u32 %v757, 4294901760
        %2669 = vmatpush.msra.mxu0 %v2668
        %v2670 = vand.u32 %v749, 4294901760
        %2671 = vmatpush.msra.mxu0 %v2670
        %v2672 = vand.u32 %v741, 4294901760
        %2673 = vmatpush.msra.mxu0 %v2672
        %v2674 = vand.u32 %v733, 4294901760
        %2675 = vmatpush.msra.mxu0 %v2674
        %v2676 = vand.u32 %v822, 4294901760
        %v2677 = vsub.f32 %v822, %v2676
        %v2678 = vand.u32 %v2677, 4294901760
        %2679 = vmatmul.f32.gmra.mxu0 %v2678
        %v2680 = vpop.f32.mrf.mxu0
        %v2681 = vadd.f32 %v2647, %v2680
        %v2682 = vand.u32 %v825, 4294901760
        %v2683 = vsub.f32 %v825, %v2682
        %v2684 = vand.u32 %v2683, 4294901760
        %2685 = vmatmul.f32.gmra.mxu0 %v2684
        %v2686 = vpop.f32.mrf.mxu0
        %v2687 = vadd.f32 %v2652, %v2686
        %2688 = vdwg.mxu0
        %2689 = vmatpush.msra.mxu0 0.0
        %2690 = vmatpush.msra.mxu0 0.0
        %2691 = vmatpush.msra.mxu0 0.0
        %2692 = vmatpush.msra.mxu0 0.0
        %2693 = vmatpush.msra.mxu0 0.0
        %2694 = vmatpush.msra.mxu0 0.0
        %2695 = vmatpush.msra.mxu0 0.0
        %2696 = vmatpush.msra.mxu0 0.0
        %2697 = vmatpush.msra.mxu0 0.0
        %2698 = vmatpush.msra.mxu0 0.0
        %v2699 = vand.u32 %v773, 4294901760
        %v2700 = vsub.f32 %v773, %v2699
        %v2701 = vand.u32 %v2700, 4294901760
        %2702 = vmatpush.msra.mxu0 %v2701
        %v2703 = vand.u32 %v765, 4294901760
        %v2704 = vsub.f32 %v765, %v2703
        %v2705 = vand.u32 %v2704, 4294901760
        %2706 = vmatpush.msra.mxu0 %v2705
        %v2707 = vand.u32 %v757, 4294901760
        %v2708 = vsub.f32 %v757, %v2707
        %v2709 = vand.u32 %v2708, 4294901760
        %2710 = vmatpush.msra.mxu0 %v2709
        %v2711 = vand.u32 %v749, 4294901760
        %v2712 = vsub.f32 %v749, %v2711
        %v2713 = vand.u32 %v2712, 4294901760
        %2714 = vmatpush.msra.mxu0 %v2713
        %v2715 = vand.u32 %v741, 4294901760
        %v2716 = vsub.f32 %v741, %v2715
        %v2717 = vand.u32 %v2716, 4294901760
        %2718 = vmatpush.msra.mxu0 %v2717
        %v2719 = vand.u32 %v733, 4294901760
        %v2720 = vsub.f32 %v733, %v2719
        %v2721 = vand.u32 %v2720, 4294901760
        %2722 = vmatpush.msra.mxu0 %v2721
        %v2723 = vand.u32 %v822, 4294901760
        %2724 = vmatmul.f32.gmra.mxu0 %v2723
        %v2725 = vpop.f32.mrf.mxu0
        %v2726 = vadd.f32 %v2681, %v2725
        %v2727 = vand.u32 %v825, 4294901760
        %2728 = vmatmul.f32.gmra.mxu0 %v2727
        %v2729 = vpop.f32.mrf.mxu0
        %v2730 = vadd.f32 %v2687, %v2729
        %2731 = vdwg.mxu0
        %2732 = vmatpush.msra.mxu0 0.0
        %2733 = vmatpush.msra.mxu0 0.0
        %2734 = vmatpush.msra.mxu0 0.0
        %2735 = vmatpush.msra.mxu0 0.0
        %2736 = vmatpush.msra.mxu0 0.0
        %2737 = vmatpush.msra.mxu0 0.0
        %2738 = vmatpush.msra.mxu0 0.0
        %2739 = vmatpush.msra.mxu0 0.0
        %2740 = vmatpush.msra.mxu0 0.0
        %2741 = vmatpush.msra.mxu0 0.0
        %v2742 = vand.u32 %v773, 4294901760
        %2743 = vmatpush.msra.mxu0 %v2742
        %v2744 = vand.u32 %v765, 4294901760
        %2745 = vmatpush.msra.mxu0 %v2744
        %v2746 = vand.u32 %v757, 4294901760
        %2747 = vmatpush.msra.mxu0 %v2746
        %v2748 = vand.u32 %v749, 4294901760
        %2749 = vmatpush.msra.mxu0 %v2748
        %v2750 = vand.u32 %v741, 4294901760
        %2751 = vmatpush.msra.mxu0 %v2750
        %v2752 = vand.u32 %v733, 4294901760
        %2753 = vmatpush.msra.mxu0 %v2752
        %v2754 = vand.u32 %v822, 4294901760
        %2755 = vmatmul.f32.gmra.mxu0 %v2754
        %v2756 = vpop.f32.mrf.mxu0
        %v2757 = vadd.f32 %v2726, %v2756
        %v2758 = vand.u32 %v825, 4294901760
        %2759 = vmatmul.f32.gmra.mxu0 %v2758
        %v2760 = vpop.f32.mrf.mxu0
        %v2761 = vadd.f32 %v2730, %v2760
        %2762 = vdwg.mxu0
        %v2763 = vmul.f32 %v810, %v1067
        %v2764 = vmul.f32 %v811, %v1309
        %v2765 = vmul.f32 %v812, %v1551
        %v2766 = vmul.f32 %v813, %v1793
        %v2767 = vmul.f32 %v814, %v2035
        %v2768 = vmul.f32 %v815, %v2277
        %v2769 = vmul.f32 %v816, %v2519
        %v2770 = vmul.f32 %v817, %v2761
        %v2771 = vadd.f32 %v1063, %v2763
        %v2772 = vadd.f32 %v1305, %v2764
        %v2773 = vadd.f32 %v1547, %v2765
        %v2774 = vadd.f32 %v1789, %v2766
        %v2775 = vadd.f32 %v2031, %v2767
        %v2776 = vadd.f32 %v2273, %v2768
        %v2777 = vadd.f32 %v2515, %v2769
        %v2778 = vadd.f32 %v2757, %v2770
        %2779 = vst [vmem:[%s177] sm:$0xff] %v2771
        %2780 = vst [vmem:[%s177 + $0x8] sm:$0xff] %v2772
        %2781 = vst [vmem:[%s177 + $0x10] sm:$0xff] %v2773
        %2782 = vst [vmem:[%s177 + $0x18] sm:$0xff] %v2774
        %2783 = vst [vmem:[%s177 + $0x20] sm:$0xff] %v2775
        %2784 = vst [vmem:[%s177 + $0x28] sm:$0xff] %v2776
        %2785 = vst [vmem:[%s177 + $0x30] sm:$0xff] %v2777
        %2786 = vst [vmem:[%s177 + $0x38] sm:$0xff] %v2778
        %s2787 = sand.u32 %s75, 1
        %s2788 = scalar_lea.sflag [#allocation4], %s2787
        %s2789 = sand.u32 %s75, 1
        %s2790 = smul.addr %s2789, 64
        %s2791 = scalar_lea.vmem [#allocation7], %s2790
        // Predicated region
        $region37: #{tpu_custom_call.1} parent=27 // pred_check
          %p2792 = pneg %p85
        $region38: #{tpu_custom_call.1} parent=27 // pred_check_branch
          %2794 = sbr.rel (%p2792) target = $region40
        $region39: #{tpu_custom_call.1} parent=27 // pred_region
          %s2795 = smul.u32 8, %s20
          %2797 = vsyncadd %s2788, 0
          %s2798 = smul.addr %s2795, 8
          %s2799 = scalar_lea.hbm %s2, %s2798
          %s2801 = sshll.u32 %s2791, 4
          %s2802 = int_to_ptr.vmem [resolvable:$true] %s2801
          %s2803 = sshll.u32 %s2799, 4
          %s2804 = int_to_ptr.hbm [resolvable:$true] %s2803
          %2806 = dma.vmem_to_hbm [thread:$0]  %s2802, 1024, %s2804, %s2788
        $region40: #{tpu_custom_call.1} parent=27 // pred_fallthru
          _
      $region28: #{tpu_custom_call.1} parent=5 // pred_fallthru
        _
      %p2807 = scmp.le.s32.totalorder 2, %s15
      // Predicated region
      $region41: #{tpu_custom_call.1} parent=5 // pred_check
        %p2808 = pneg %p2807
      $region42: #{tpu_custom_call.1} parent=5 // pred_check_branch
        %2810 = sbr.rel (%p2808) target = $region44
      $region43: #{tpu_custom_call.1} parent=5 // pred_region
        %s2811 = ssub.s32 %s15, 2
        // Predicated region
        $region45: #{tpu_custom_call.1} parent=43 // pred_check
          %p2812 = pneg %p91
        $region46: #{tpu_custom_call.1} parent=43 // pred_check_branch
          %2814 = sbr.rel (%p2812) target = $region48
        $region47: #{tpu_custom_call.1} parent=43 // pred_region
          %s2815 = sand.u32 %s76, 1
          %s2816 = scalar_lea.sflag [#allocation4], %s2815
          %s2817 = sand.u32 %s76, 1
          %s2818 = smul.addr %s2817, 64
          %s2819 = scalar_lea.vmem [#allocation7], %s2818
          %2821 = dma.done %s2816, 1024
        $region48: #{tpu_custom_call.1} parent=43 // pred_fallthru
          _
      $region44: #{tpu_custom_call.1} parent=5 // pred_fallthru
        _
    $region6: #{tpu_custom_call.1} parent=1 // loop_footer
      %s19 = sadd.s32 1, %s15
    $region7: #{tpu_custom_call.1} parent=1 // loop_footer_branch
      %14 = sbr.rel target = $region3
    $region8: #{tpu_custom_call.1} parent=1 // loop_exit
      _
    %2822 = vsyncpa [#allocation3], 1
    %s2823 = scalar_lea.sflag [#allocation3], 1
    %2824 = vsyncpa %s2823, 1
    %2825 = vsyncpa [#allocation6], 1
    %2826 = vsyncpa [#allocation4], 1
    %s2827 = scalar_lea.sflag [#allocation4], 1
    %2828 = vsyncpa %s2827, 1

</llo_original>
